<compile_context>
chip_gen: v7x
topology: tpu7x:2x2x1
jax: 0.10.0
libtpu: 0.0.40
codegen_flags: <defaults>
</compile_context>

<pallas_src>
import jax
import jax.numpy as jnp
from jax.experimental import pallas as pl
from jax.experimental.pallas import tpu as pltpu

LANE = 128                          # lane-dense output width (prediction = col 0)
_VMEM_LIMIT = 48 * 1024 * 1024      # scoped VMEM limit, safe on v5e/v6e/v7x
_X_TILE_BUDGET = 12 * 1024 * 1024   # streamed activation bytes per grid step


# ----------------------------------------------------------------------------
# Tile selection helpers
# ----------------------------------------------------------------------------
def _pick_tile(n, pref, align):
    """Largest multiple of `align` that divides n and is <= pref; else n (full)."""
    if n <= pref or n % align != 0:
        return n
    t = (pref // align) * align
    while t >= align:
        if n % t == 0:
            return t
        t -= align
    return n


def _pick_t_tile(T, tb, bytes_per_bt, budget):
    """T tile (multiple of 128, or full T) keeping tb*tt*bytes_per_bt near budget."""
    per_t = max(1, tb * bytes_per_bt)
    pref = max(128, budget // per_t)
    return _pick_tile(T, pref, 128)


# ----------------------------------------------------------------------------
# In-kernel helpers
# ----------------------------------------------------------------------------
def _accumulate_pool(x_ref, mask_ref, pool_acc, den_acc):
    # x_ref: (TB, TT, D) bf16;  mask_ref: (TB, 1, TT) f32 (1.0 == padded)
    valid = 1.0 - mask_ref[...]                                     # (TB, 1, TT) f32
    x = x_ref[...]                                                  # (TB, TT, D)
    # Masked T-contraction on the MXU (flash-attention-style batched matmul).
    pool_acc[...] += jnp.einsum("bqt,btd->bqd", valid.astype(x.dtype), x,
                                preferred_element_type=jnp.float32)  # (TB, 1, D) f32
    den_acc[...] += jnp.sum(valid, axis=2, keepdims=True)            # (TB, 1, 1) f32


def _finalize_encode(pool_acc, den_acc, we_ref, be_ref):
    # Division / clamp only after the full-T accumulation.
    we = we_ref[...]                                                 # (D, H) bf16
    pooled3 = pool_acc[...] / jnp.maximum(den_acc[...], 1.0)         # (TB, 1, D) f32
    pooled = jnp.sum(pooled3, axis=1)                                # (TB, D) f32
    h = jnp.dot(pooled.astype(we.dtype), we,
                preferred_element_type=jnp.float32) + be_ref[...]    # (TB, H) f32
    return jnp.maximum(h, 0.0)


# ----------------------------------------------------------------------------
# Kernel 1: fused unimodal path (masked-mean encoder + 2-layer MLP head)
# ----------------------------------------------------------------------------
def _unimodal_kernel(x_ref, mask_ref, we_ref, be_ref,
                     w1_ref, b1_ref, w2_ref, b2_ref,
                     o_ref, pool_acc, den_acc):
    t = pl.program_id(1)

    @pl.when(t == 0)
    def _():
        pool_acc[...] = jnp.zeros_like(pool_acc)
        den_acc[...] = jnp.zeros_like(den_acc)

    _accumulate_pool(x_ref, mask_ref, pool_acc, den_acc)

    @pl.when(t == pl.num_programs(1) - 1)
    def _():
        h = _finalize_encode(pool_acc, den_acc, we_ref, be_ref)
        z = jnp.maximum(
            jnp.dot(h, w1_ref[...], preferred_element_type=jnp.float32) + b1_ref[...],
            0.0)
        # w2/b2 are zero-padded to LANE columns -> unmasked lane-dense store.
        o_ref[...] = (jnp.dot(z, w2_ref[...], preferred_element_type=jnp.float32)
                      + b2_ref[...])


def unimodal_forward(x, mask, we, be, w1, b1, w2p, b2p):
    """x: (B,T,D); mask: (B,T) (1.0 == pad). Returns (B, 1) prediction."""
    B, T, D = x.shape
    x = x.astype(jnp.bfloat16)                        # bf16 stream, f32 accumulation
    mask3 = mask.astype(jnp.float32)[:, None, :]      # (B, 1, T)

    tb = _pick_tile(B, 128, 8)
    tt = _pick_t_tile(T, tb, D * 2, _X_TILE_BUDGET)
    grid = (B // tb, T // tt)

    const = lambda i, t: (0, 0)
    in_specs = [
        pl.BlockSpec((tb, tt, D), lambda i, t: (i, t, 0)),
        pl.BlockSpec((tb, 1, tt), lambda i, t: (i, 0, t)),
        pl.BlockSpec(we.shape, const), pl.BlockSpec(be.shape, const),
        pl.BlockSpec(w1.shape, const), pl.BlockSpec(b1.shape, const),
        pl.BlockSpec(w2p.shape, const), pl.BlockSpec(b2p.shape, const),
    ]
    H, F = w1.shape
    flops = 2 * B * T * D + 2 * B * (D * H + H * F + F * LANE)
    bytes_acc = (int(x.size) * 2 + int(mask3.size) * 4
                 + 4 * (int(we.size) + int(w1.size) + int(w2p.size)) + B * LANE * 4)

    out = pl.pallas_call(
        _unimodal_kernel,
        out_shape=jax.ShapeDtypeStruct((B, LANE), jnp.float32),
        grid_spec=pltpu.PrefetchScalarGridSpec(
            num_scalar_prefetch=0,
            grid=grid,
            in_specs=in_specs,
            out_specs=pl.BlockSpec((tb, LANE), lambda i, t: (i, 0)),
            scratch_shapes=[pltpu.VMEM((tb, 1, D), jnp.float32),
                            pltpu.VMEM((tb, 1, 1), jnp.float32)]),
        compiler_params=pltpu.CompilerParams(
            dimension_semantics=("parallel", "arbitrary"),
            vmem_limit_bytes=_VMEM_LIMIT),
        cost_estimate=pl.CostEstimate(flops=flops, transcendentals=0,
                                      bytes_accessed=bytes_acc),
    )(x, mask3, we, be, w1, b1, w2p, b2p)
    return out[:, :1]


# ----------------------------------------------------------------------------
# Kernel 2: fused fusion path (3 encoders + single-dot fusion MLP head)
# ----------------------------------------------------------------------------
def _make_fusion_kernel(nts, hidden):
    nt_t, nt_a, nt_v = nts
    nt_max = max(nts)

    def kernel(xt_ref, mt_ref, xa_ref, ma_ref, xv_ref, mv_ref,
               wet_ref, bet_ref, wea_ref, bea_ref, wev_ref, bev_ref,
               w1_ref, b1_ref, w2_ref, b2_ref, o_ref,
               pt_acc, dt_acc, pa_acc, da_acc, pv_acc, dv_acc, hcat_ref):
        t = pl.program_id(1)

        @pl.when(t == 0)
        def _():
            for acc in (pt_acc, dt_acc, pa_acc, da_acc, pv_acc, dv_acc):
                acc[...] = jnp.zeros_like(acc)

        # Per-modality T-tile counts may differ; exhausted modalities are skipped
        # (their clamped block index stops changing -> no re-DMA either).
        @pl.when(t < nt_t)
        def _():
            _accumulate_pool(xt_ref, mt_ref, pt_acc, dt_acc)

        @pl.when(t < nt_a)
        def _():
            _accumulate_pool(xa_ref, ma_ref, pa_acc, da_acc)

        @pl.when(t < nt_v)
        def _():
            _accumulate_pool(xv_ref, mv_ref, pv_acc, dv_acc)

        @pl.when(t == nt_max - 1)
        def _():
            # Store the three encodings at lane offsets of one VMEM scratch and do
            # ONE K = 3*hidden dot against the original fusion W1 (HIDDEN < 128).
            hcat_ref[:, 0:hidden] = _finalize_encode(pt_acc, dt_acc, wet_ref, bet_ref)
            hcat_ref[:, hidden:2 * hidden] = _finalize_encode(pa_acc, da_acc,
                                                              wea_ref, bea_ref)
            hcat_ref[:, 2 * hidden:3 * hidden] = _finalize_encode(pv_acc, dv_acc,
                                                                  wev_ref, bev_ref)
            z = jnp.maximum(
                jnp.dot(hcat_ref[...], w1_ref[...],
                        preferred_element_type=jnp.float32) + b1_ref[...], 0.0)
            o_ref[...] = (jnp.dot(z, w2_ref[...], preferred_element_type=jnp.float32)
                          + b2_ref[...])

    return kernel


def fusion_forward(text, text_mask, audio, audio_mask, vision, vision_mask, p):
    B = text.shape[0]
    xs = [text.astype(jnp.bfloat16), audio.astype(jnp.bfloat16),
          vision.astype(jnp.bfloat16)]
    masks = [m.astype(jnp.float32)[:, None, :]
             for m in (text_mask, audio_mask, vision_mask)]
    Ts = [x.shape[1] for x in xs]
    Ds = [x.shape[2] for x in xs]

    tb = _pick_tile(B, 128, 8)
    tts = [_pick_t_tile(t, tb, d * 2, _X_TILE_BUDGET // 3) for t, d in zip(Ts, Ds)]
    nts = tuple(t // tt for t, tt in zip(Ts, tts))
    nt_max = max(nts)
    hidden = p["text_enc_w"].shape[1]
    ffn = p["fuse_h1_w"].shape[1]

    def x_spec(d, tt, nt):
        return pl.BlockSpec((tb, tt, d),
                            lambda i, t: (i, jnp.minimum(t, nt - 1), 0))

    def m_spec(tt, nt):
        return pl.BlockSpec((tb, 1, tt),
                            lambda i, t: (i, 0, jnp.minimum(t, nt - 1)))

    const = lambda i, t: (0, 0)
    weights = (p["text_enc_w"], p["text_enc_b"],
               p["audio_enc_w"], p["audio_enc_b"],
               p["vision_enc_w"], p["vision_enc_b"],
               p["fuse_h1_w"], p["fuse_h1_b"], p["fuse_h2_w"], p["fuse_h2_b"])

    operands, in_specs = [], []
    for x, m, d, tt, nt in zip(xs, masks, Ds, tts, nts):
        operands += [x, m]
        in_specs += [x_spec(d, tt, nt), m_spec(tt, nt)]
    operands += list(weights)
    in_specs += [pl.BlockSpec(w.shape, const) for w in weights]

    scratch = []
    for d in Ds:
        scratch += [pltpu.VMEM((tb, 1, d), jnp.float32),
                    pltpu.VMEM((tb, 1, 1), jnp.float32)]
    scratch.append(pltpu.VMEM((tb, 3 * hidden), jnp.float32))

    flops = (sum(2 * B * t * d for t, d in zip(Ts, Ds))
             + 2 * B * (sum(Ds) * hidden + 3 * hidden * ffn + ffn * LANE))
    bytes_acc = (sum(int(x.size) * 2 + int(m.size) * 4 for x, m in zip(xs, masks))
                 + sum(int(w.size) * 4 for w in weights) + B * LANE * 4)

    out = pl.pallas_call(
        _make_fusion_kernel(nts, hidden),
        out_shape=jax.ShapeDtypeStruct((B, LANE), jnp.float32),
        grid_spec=pltpu.PrefetchScalarGridSpec(
            num_scalar_prefetch=0,
            grid=(B // tb, nt_max),
            in_specs=in_specs,
            out_specs=pl.BlockSpec((tb, LANE), lambda i, t: (i, 0)),
            scratch_shapes=scratch),
        compiler_params=pltpu.CompilerParams(
            dimension_semantics=("parallel", "arbitrary"),
            vmem_limit_bytes=_VMEM_LIMIT),
        cost_estimate=pl.CostEstimate(flops=flops, transcendentals=0,
                                      bytes_accessed=bytes_acc),
    )(*operands)
    return out[:, :1]


# ----------------------------------------------------------------------------
# Parameter construction (deterministic, synthetic)
# ----------------------------------------------------------------------------
def _xavier(key, shape):
    fan_in = shape[0]
    return jax.random.normal(key, shape, jnp.float32) / jnp.sqrt(jnp.float32(fan_in))


def _pad_lanes(w, width=LANE):
    # zero-pad last dim to `width` so the kernel's final store is lane-dense
    return jnp.pad(w, ((0, 0), (0, width - w.shape[-1])))


def init_params(key, d_text, d_audio, d_vision, hidden, ffn):
    keys = jax.random.split(key, 16)
    p = {}
    for i, (name, d) in enumerate([("text", d_text), ("audio", d_audio),
                                   ("vision", d_vision)]):
        # encoder (masked-mean-pool + Linear + ReLU); weights bf16 for MXU streaming
        p[f"{name}_enc_w"] = _xavier(keys[i], (d, hidden)).astype(jnp.bfloat16)
        p[f"{name}_enc_b"] = jnp.zeros((1, hidden), jnp.float32)
        # per-modality (unimodal) regression head
        p[f"{name}_h1_w"] = _xavier(keys[3 + i], (hidden, ffn))
        p[f"{name}_h1_b"] = jnp.zeros((1, ffn), jnp.float32)
        # Linear(ffn, 1) padded to 128 output lanes (real column at index 0)
        p[f"{name}_h2_w"] = _pad_lanes(_xavier(keys[6 + i], (ffn, 1)))
        p[f"{name}_h2_b"] = jnp.zeros((1, LANE), jnp.float32)
    # fusion head (MAF-style): Linear(3*hidden, ffn) -> ReLU -> Linear(ffn, 1)
    p["fuse_h1_w"] = _xavier(keys[9], (3 * hidden, ffn))
    p["fuse_h1_b"] = jnp.zeros((1, ffn), jnp.float32)
    p["fuse_h2_w"] = _pad_lanes(_xavier(keys[10], (ffn, 1)))
    p["fuse_h2_b"] = jnp.zeros((1, LANE), jnp.float32)
    return p


# ----------------------------------------------------------------------------
# AMIO wrapper — reproduces the dispatch semantics of the PyTorch module
# ----------------------------------------------------------------------------
class AMIO:
    def __init__(self, params):
        self.p = params

    def _maybe_loss(self, pred, labels):
        if labels is None:
            return pred
        loss = jnp.mean((pred - labels.astype(jnp.float32)) ** 2)  # glue (MSE)
        return pred, loss

    def _unimodal(self, name, feats, key_padding_mask, labels):
        B, T, _ = feats.shape
        if key_padding_mask is None:
            mask = jnp.zeros((B, T), jnp.float32)
        else:
            mask = key_padding_mask.astype(jnp.float32)
        pred = unimodal_forward(
            feats, mask,
            self.p[f"{name}_enc_w"], self.p[f"{name}_enc_b"],
            self.p[f"{name}_h1_w"], self.p[f"{name}_h1_b"],
            self.p[f"{name}_h2_w"], self.p[f"{name}_h2_b"])
        return self._maybe_loss(pred, labels)

    def _fusion(self, text, audio, vision, audio_mask, vision_mask, labels):
        text_mask = jnp.zeros(text.shape[:2], jnp.float32)
        audio_mask = (jnp.zeros(audio.shape[:2], jnp.float32) if audio_mask is None
                      else audio_mask.astype(jnp.float32))
        vision_mask = (jnp.zeros(vision.shape[:2], jnp.float32) if vision_mask is None
                       else vision_mask.astype(jnp.float32))
        pred = fusion_forward(text, text_mask, audio, audio_mask,
                              vision, vision_mask, self.p)
        return self._maybe_loss(pred, labels)

    def __call__(self, text=None, audio=None, vision=None,
                 audio_mask=None, vision_mask=None, labels=None):
        if text is not None and audio is None and vision is None:
            return self._unimodal("text", text, None, labels)
        if vision is not None and audio is None and text is None:
            return self._unimodal("vision", vision, vision_mask, labels)
        if audio is not None and vision is None and text is None:
            return self._unimodal("audio", audio, audio_mask, labels)
        if text is not None and audio is not None and vision is not None:
            return self._fusion(text, audio, vision, audio_mask, vision_mask, labels)
        return None


# ----------------------------------------------------------------------------
if __name__ == "__main__":
    B = 2
    T = 8
    D_TEXT, D_AUDIO, D_VISION = 32, 16, 20
    HIDDEN, FFN = 32, 64

    key = jax.random.PRNGKey(0)
    k_p, k_t, k_a, k_v, k_l = jax.random.split(key, 5)

    params = init_params(k_p, D_TEXT, D_AUDIO, D_VISION, HIDDEN, FFN)
    model = AMIO(params)

    text = jax.random.normal(k_t, (B, T, D_TEXT), jnp.float32)
    audio = jax.random.normal(k_a, (B, T, D_AUDIO), jnp.float32)
    vision = jax.random.normal(k_v, (B, T, D_VISION), jnp.float32)
    # key_padding_mask convention: True == padded
    audio_mask = jnp.array([[0, 0, 0, 0, 0, 0, 1, 1],
                            [0, 0, 0, 0, 0, 0, 0, 0]], jnp.bool_)
    vision_mask = jnp.array([[0, 0, 0, 0, 1, 1, 1, 1],
                             [0, 0, 0, 0, 0, 0, 0, 0]], jnp.bool_)
    labels = jax.random.normal(k_l, (B, 1), jnp.float32)

    # fusion path (text + audio + vision) — single fused pallas_call
    pred, loss = model(text=text, audio=audio, vision=vision,
                       audio_mask=audio_mask, vision_mask=vision_mask, labels=labels)
    jax.block_until_ready(pred)
    jax.block_until_ready(loss)
    assert pred.shape == (B, 1)

    # unimodal dispatch paths (text-only / audio-only / vision-only)
    p_t = model(text=text, labels=None)
    p_a = model(audio=audio, audio_mask=audio_mask, labels=None)
    p_v = model(vision=vision, vision_mask=vision_mask, labels=None)
    jax.block_until_ready((p_t, p_a, p_v))
    assert p_t.shape == (B, 1) and p_a.shape == (B, 1) and p_v.shape == (B, 1)

    print("KERNEL_OK")
</pallas_src>

<mosaic_0001>
module attributes {stable_mosaic.version = 11 : i64} {
  func.func @kernel(%arg0: i32, %arg1: i32, %arg2: memref<2x8x32xbf16, #tpu.memory_space<vmem>>, %arg3: memref<2x1x8xf32, #tpu.memory_space<vmem>>, %arg4: memref<2x8x16xbf16, #tpu.memory_space<vmem>>, %arg5: memref<2x1x8xf32, #tpu.memory_space<vmem>>, %arg6: memref<2x8x20xbf16, #tpu.memory_space<vmem>>, %arg7: memref<2x1x8xf32, #tpu.memory_space<vmem>>, %arg8: memref<32x32xbf16, #tpu.memory_space<vmem>>, %arg9: memref<1x32xf32, #tpu.memory_space<vmem>>, %arg10: memref<16x32xbf16, #tpu.memory_space<vmem>>, %arg11: memref<1x32xf32, #tpu.memory_space<vmem>>, %arg12: memref<20x32xbf16, #tpu.memory_space<vmem>>, %arg13: memref<1x32xf32, #tpu.memory_space<vmem>>, %arg14: memref<96x64xf32, #tpu.memory_space<vmem>>, %arg15: memref<1x64xf32, #tpu.memory_space<vmem>>, %arg16: memref<64x128xf32, #tpu.memory_space<vmem>>, %arg17: memref<1x128xf32, #tpu.memory_space<vmem>>, %arg18: memref<2x128xf32, #tpu.memory_space<vmem>>, %arg19: memref<2x1x32xf32, #tpu.memory_space<vmem>>, %arg20: memref<2x1x1xf32, #tpu.memory_space<vmem>>, %arg21: memref<2x1x16xf32, #tpu.memory_space<vmem>>, %arg22: memref<2x1x1xf32, #tpu.memory_space<vmem>>, %arg23: memref<2x1x20xf32, #tpu.memory_space<vmem>>, %arg24: memref<2x1x1xf32, #tpu.memory_space<vmem>>, %arg25: memref<2x96xf32, #tpu.memory_space<vmem>>) attributes {dimension_semantics = [#tpu.dimension_semantics<parallel>, #tpu.dimension_semantics<arbitrary>], iteration_bounds = array<i64: 1, 1>, scalar_prefetch = 0 : i64, scratch_operands = 7 : i64, tpu.core_type = #tpu.core_type<tc>, window_params = [{transform_indices = @transform_0, window_bounds = array<i64: 2, 8, 32>}, {transform_indices = @transform_1, window_bounds = array<i64: 2, 1, 8>}, {transform_indices = @transform_2, window_bounds = array<i64: 2, 8, 16>}, {transform_indices = @transform_3, window_bounds = array<i64: 2, 1, 8>}, {transform_indices = @transform_4, window_bounds = array<i64: 2, 8, 20>}, {transform_indices = @transform_5, window_bounds = array<i64: 2, 1, 8>}, {pipeline_mode = #tpu.pipeline_mode<synchronous>, transform_indices = @transform_6, window_bounds = array<i64: 32, 32>}, {pipeline_mode = #tpu.pipeline_mode<synchronous>, transform_indices = @transform_7, window_bounds = array<i64: 1, 32>}, {pipeline_mode = #tpu.pipeline_mode<synchronous>, transform_indices = @transform_8, window_bounds = array<i64: 16, 32>}, {pipeline_mode = #tpu.pipeline_mode<synchronous>, transform_indices = @transform_9, window_bounds = array<i64: 1, 32>}, {pipeline_mode = #tpu.pipeline_mode<synchronous>, transform_indices = @transform_10, window_bounds = array<i64: 20, 32>}, {pipeline_mode = #tpu.pipeline_mode<synchronous>, transform_indices = @transform_11, window_bounds = array<i64: 1, 32>}, {pipeline_mode = #tpu.pipeline_mode<synchronous>, transform_indices = @transform_12, window_bounds = array<i64: 96, 64>}, {pipeline_mode = #tpu.pipeline_mode<synchronous>, transform_indices = @transform_13, window_bounds = array<i64: 1, 64>}, {pipeline_mode = #tpu.pipeline_mode<synchronous>, transform_indices = @transform_14, window_bounds = array<i64: 64, 128>}, {pipeline_mode = #tpu.pipeline_mode<synchronous>, transform_indices = @transform_15, window_bounds = array<i64: 1, 128>}, {transform_indices = @transform_16, window_bounds = array<i64: 2, 128>}]} {
    %c0_i32 = arith.constant 0 : i32
    %0 = arith.cmpi eq, %arg1, %c0_i32 : i32
    %1 = arith.extui %0 : i1 to i32
    %c0_i32_0 = arith.constant 0 : i32
    %2 = arith.cmpi ne, %1, %c0_i32_0 : i32
    scf.if %2 {
      %cst = arith.constant 0.000000e+00 : f32
      %15 = vector.broadcast %cst : f32 to vector<2x1x32xf32>
      %c0 = arith.constant 0 : index
      %c0_8 = arith.constant 0 : index
      %c0_9 = arith.constant 0 : index
      %16 = vector.load %arg19[%c0, %c0_8, %c0_9] : memref<2x1x32xf32, #tpu.memory_space<vmem>>, vector<2x1x32xf32>
      tpu.vector_store %arg19[%c0, %c0_8, %c0_9], %15 {strides = array<i32>} : memref<2x1x32xf32, #tpu.memory_space<vmem>>, vector<2x1x32xf32>,
      %cst_10 = arith.constant 0.000000e+00 : f32
      %17 = vector.broadcast %cst_10 : f32 to vector<2x1x1xf32>
      %c0_11 = arith.constant 0 : index
      %c0_12 = arith.constant 0 : index
      %c0_13 = arith.constant 0 : index
      %18 = vector.load %arg20[%c0_11, %c0_12, %c0_13] : memref<2x1x1xf32, #tpu.memory_space<vmem>>, vector<2x1x1xf32>
      tpu.vector_store %arg20[%c0_11, %c0_12, %c0_13], %17 {strides = array<i32>} : memref<2x1x1xf32, #tpu.memory_space<vmem>>, vector<2x1x1xf32>,
      %cst_14 = arith.constant 0.000000e+00 : f32
      %19 = vector.broadcast %cst_14 : f32 to vector<2x1x16xf32>
      %c0_15 = arith.constant 0 : index
      %c0_16 = arith.constant 0 : index
      %c0_17 = arith.constant 0 : index
      %20 = vector.load %arg21[%c0_15, %c0_16, %c0_17] : memref<2x1x16xf32, #tpu.memory_space<vmem>>, vector<2x1x16xf32>
      tpu.vector_store %arg21[%c0_15, %c0_16, %c0_17], %19 {strides = array<i32>} : memref<2x1x16xf32, #tpu.memory_space<vmem>>, vector<2x1x16xf32>,
      %cst_18 = arith.constant 0.000000e+00 : f32
      %21 = vector.broadcast %cst_18 : f32 to vector<2x1x1xf32>
      %c0_19 = arith.constant 0 : index
      %c0_20 = arith.constant 0 : index
      %c0_21 = arith.constant 0 : index
      %22 = vector.load %arg22[%c0_19, %c0_20, %c0_21] : memref<2x1x1xf32, #tpu.memory_space<vmem>>, vector<2x1x1xf32>
      tpu.vector_store %arg22[%c0_19, %c0_20, %c0_21], %21 {strides = array<i32>} : memref<2x1x1xf32, #tpu.memory_space<vmem>>, vector<2x1x1xf32>,
      %cst_22 = arith.constant 0.000000e+00 : f32
      %23 = vector.broadcast %cst_22 : f32 to vector<2x1x20xf32>
      %c0_23 = arith.constant 0 : index
      %c0_24 = arith.constant 0 : index
      %c0_25 = arith.constant 0 : index
      %24 = vector.load %arg23[%c0_23, %c0_24, %c0_25] : memref<2x1x20xf32, #tpu.memory_space<vmem>>, vector<2x1x20xf32>
      tpu.vector_store %arg23[%c0_23, %c0_24, %c0_25], %23 {strides = array<i32>} : memref<2x1x20xf32, #tpu.memory_space<vmem>>, vector<2x1x20xf32>,
      %cst_26 = arith.constant 0.000000e+00 : f32
      %25 = vector.broadcast %cst_26 : f32 to vector<2x1x1xf32>
      %c0_27 = arith.constant 0 : index
      %c0_28 = arith.constant 0 : index
      %c0_29 = arith.constant 0 : index
      %26 = vector.load %arg24[%c0_27, %c0_28, %c0_29] : memref<2x1x1xf32, #tpu.memory_space<vmem>>, vector<2x1x1xf32>
      tpu.vector_store %arg24[%c0_27, %c0_28, %c0_29], %25 {strides = array<i32>} : memref<2x1x1xf32, #tpu.memory_space<vmem>>, vector<2x1x1xf32>,
    } else {
    }
    %c1_i32 = arith.constant 1 : i32
    %3 = arith.cmpi slt, %arg1, %c1_i32 : i32
    %4 = arith.extui %3 : i1 to i32
    %c0_i32_1 = arith.constant 0 : i32
    %5 = arith.cmpi ne, %4, %c0_i32_1 : i32
    scf.if %5 {
      %c0 = arith.constant 0 : index
      %c0_8 = arith.constant 0 : index
      %c0_9 = arith.constant 0 : index
      %15 = vector.load %arg3[%c0, %c0_8, %c0_9] : memref<2x1x8xf32, #tpu.memory_space<vmem>>, vector<2x1x8xf32>
      %cst = arith.constant 1.000000e+00 : f32
      %16 = vector.broadcast %cst : f32 to vector<2x1x8xf32>
      %17 = arith.subf %16, %15 : vector<2x1x8xf32>
      %c0_10 = arith.constant 0 : index
      %c0_11 = arith.constant 0 : index
      %c0_12 = arith.constant 0 : index
      %18 = vector.load %arg2[%c0_10, %c0_11, %c0_12] : memref<2x8x32xbf16, #tpu.memory_space<vmem>>, vector<2x8x32xbf16>
      %c0_13 = arith.constant 0 : index
      %c0_14 = arith.constant 0 : index
      %c0_15 = arith.constant 0 : index
      %19 = vector.load %arg19[%c0_13, %c0_14, %c0_15] : memref<2x1x32xf32, #tpu.memory_space<vmem>>, vector<2x1x32xf32>
      %20 = arith.truncf %17 : vector<2x1x8xf32> to vector<2x1x8xbf16>
      "tpu.trace_start"() <{level = 10 : i32, message = "bqt,btd->bqd"}> : () -> ()
      %cst_16 = arith.constant dense<0.000000e+00> : vector<2x1x32xf32>
      %21 = tpu.matmul %20, %18, %cst_16 {dimension_numbers = #tpu.dot_dimension_numbers<[2], [1], [1], [2], [0, 0, 0, 1, 1, 2], [0], [0]>} : vector<2x1x8xbf16>, vector<2x8x32xbf16>, vector<2x1x32xf32> -> vector<2x1x32xf32>
      "tpu.trace_stop"() : () -> ()
      %22 = arith.addf %19, %21 : vector<2x1x32xf32>
      %c0_17 = arith.constant 0 : index
      %c0_18 = arith.constant 0 : index
      %c0_19 = arith.constant 0 : index
      %23 = vector.load %arg19[%c0_17, %c0_18, %c0_19] : memref<2x1x32xf32, #tpu.memory_space<vmem>>, vector<2x1x32xf32>
      tpu.vector_store %arg19[%c0_17, %c0_18, %c0_19], %22 {strides = array<i32>} : memref<2x1x32xf32, #tpu.memory_space<vmem>>, vector<2x1x32xf32>,
      %c0_20 = arith.constant 0 : index
      %c0_21 = arith.constant 0 : index
      %c0_22 = arith.constant 0 : index
      %24 = vector.load %arg20[%c0_20, %c0_21, %c0_22] : memref<2x1x1xf32, #tpu.memory_space<vmem>>, vector<2x1x1xf32>
      %cst_23 = arith.constant dense<0.000000e+00> : vector<2x1xf32>
      %25 = vector.multi_reduction <add>, %17, %cst_23 [2] : vector<2x1x8xf32> to vector<2x1xf32>
      %26 = vector.shape_cast %25 : vector<2x1xf32> to vector<2x1x1xf32>
      %27 = arith.addf %24, %26 : vector<2x1x1xf32>
      %c0_24 = arith.constant 0 : index
      %c0_25 = arith.constant 0 : index
      %c0_26 = arith.constant 0 : index
      %28 = vector.load %arg20[%c0_24, %c0_25, %c0_26] : memref<2x1x1xf32, #tpu.memory_space<vmem>>, vector<2x1x1xf32>
      tpu.vector_store %arg20[%c0_24, %c0_25, %c0_26], %27 {strides = array<i32>} : memref<2x1x1xf32, #tpu.memory_space<vmem>>, vector<2x1x1xf32>,
    } else {
    }
    %c1_i32_2 = arith.constant 1 : i32
    %6 = arith.cmpi slt, %arg1, %c1_i32_2 : i32
    %7 = arith.extui %6 : i1 to i32
    %c0_i32_3 = arith.constant 0 : i32
    %8 = arith.cmpi ne, %7, %c0_i32_3 : i32
    scf.if %8 {
      %c0 = arith.constant 0 : index
      %c0_8 = arith.constant 0 : index
      %c0_9 = arith.constant 0 : index
      %15 = vector.load %arg5[%c0, %c0_8, %c0_9] : memref<2x1x8xf32, #tpu.memory_space<vmem>>, vector<2x1x8xf32>
      %cst = arith.constant 1.000000e+00 : f32
      %16 = vector.broadcast %cst : f32 to vector<2x1x8xf32>
      %17 = arith.subf %16, %15 : vector<2x1x8xf32>
      %c0_10 = arith.constant 0 : index
      %c0_11 = arith.constant 0 : index
      %c0_12 = arith.constant 0 : index
      %18 = vector.load %arg4[%c0_10, %c0_11, %c0_12] : memref<2x8x16xbf16, #tpu.memory_space<vmem>>, vector<2x8x16xbf16>
      %c0_13 = arith.constant 0 : index
      %c0_14 = arith.constant 0 : index
      %c0_15 = arith.constant 0 : index
      %19 = vector.load %arg21[%c0_13, %c0_14, %c0_15] : memref<2x1x16xf32, #tpu.memory_space<vmem>>, vector<2x1x16xf32>
      %20 = arith.truncf %17 : vector<2x1x8xf32> to vector<2x1x8xbf16>
      "tpu.trace_start"() <{level = 10 : i32, message = "bqt,btd->bqd"}> : () -> ()
      %cst_16 = arith.constant dense<0.000000e+00> : vector<2x1x16xf32>
      %21 = tpu.matmul %20, %18, %cst_16 {dimension_numbers = #tpu.dot_dimension_numbers<[2], [1], [1], [2], [0, 0, 0, 1, 1, 2], [0], [0]>} : vector<2x1x8xbf16>, vector<2x8x16xbf16>, vector<2x1x16xf32> -> vector<2x1x16xf32>
      "tpu.trace_stop"() : () -> ()
      %22 = arith.addf %19, %21 : vector<2x1x16xf32>
      %c0_17 = arith.constant 0 : index
      %c0_18 = arith.constant 0 : index
      %c0_19 = arith.constant 0 : index
      %23 = vector.load %arg21[%c0_17, %c0_18, %c0_19] : memref<2x1x16xf32, #tpu.memory_space<vmem>>, vector<2x1x16xf32>
      tpu.vector_store %arg21[%c0_17, %c0_18, %c0_19], %22 {strides = array<i32>} : memref<2x1x16xf32, #tpu.memory_space<vmem>>, vector<2x1x16xf32>,
      %c0_20 = arith.constant 0 : index
      %c0_21 = arith.constant 0 : index
      %c0_22 = arith.constant 0 : index
      %24 = vector.load %arg22[%c0_20, %c0_21, %c0_22] : memref<2x1x1xf32, #tpu.memory_space<vmem>>, vector<2x1x1xf32>
      %cst_23 = arith.constant dense<0.000000e+00> : vector<2x1xf32>
      %25 = vector.multi_reduction <add>, %17, %cst_23 [2] : vector<2x1x8xf32> to vector<2x1xf32>
      %26 = vector.shape_cast %25 : vector<2x1xf32> to vector<2x1x1xf32>
      %27 = arith.addf %24, %26 : vector<2x1x1xf32>
      %c0_24 = arith.constant 0 : index
      %c0_25 = arith.constant 0 : index
      %c0_26 = arith.constant 0 : index
      %28 = vector.load %arg22[%c0_24, %c0_25, %c0_26] : memref<2x1x1xf32, #tpu.memory_space<vmem>>, vector<2x1x1xf32>
      tpu.vector_store %arg22[%c0_24, %c0_25, %c0_26], %27 {strides = array<i32>} : memref<2x1x1xf32, #tpu.memory_space<vmem>>, vector<2x1x1xf32>,
    } else {
    }
    %c1_i32_4 = arith.constant 1 : i32
    %9 = arith.cmpi slt, %arg1, %c1_i32_4 : i32
    %10 = arith.extui %9 : i1 to i32
    %c0_i32_5 = arith.constant 0 : i32
    %11 = arith.cmpi ne, %10, %c0_i32_5 : i32
    scf.if %11 {
      %c0 = arith.constant 0 : index
      %c0_8 = arith.constant 0 : index
      %c0_9 = arith.constant 0 : index
      %15 = vector.load %arg7[%c0, %c0_8, %c0_9] : memref<2x1x8xf32, #tpu.memory_space<vmem>>, vector<2x1x8xf32>
      %cst = arith.constant 1.000000e+00 : f32
      %16 = vector.broadcast %cst : f32 to vector<2x1x8xf32>
      %17 = arith.subf %16, %15 : vector<2x1x8xf32>
      %c0_10 = arith.constant 0 : index
      %c0_11 = arith.constant 0 : index
      %c0_12 = arith.constant 0 : index
      %18 = vector.load %arg6[%c0_10, %c0_11, %c0_12] : memref<2x8x20xbf16, #tpu.memory_space<vmem>>, vector<2x8x20xbf16>
      %c0_13 = arith.constant 0 : index
      %c0_14 = arith.constant 0 : index
      %c0_15 = arith.constant 0 : index
      %19 = vector.load %arg23[%c0_13, %c0_14, %c0_15] : memref<2x1x20xf32, #tpu.memory_space<vmem>>, vector<2x1x20xf32>
      %20 = arith.truncf %17 : vector<2x1x8xf32> to vector<2x1x8xbf16>
      "tpu.trace_start"() <{level = 10 : i32, message = "bqt,btd->bqd"}> : () -> ()
      %cst_16 = arith.constant dense<0.000000e+00> : vector<2x1x20xf32>
      %21 = tpu.matmul %20, %18, %cst_16 {dimension_numbers = #tpu.dot_dimension_numbers<[2], [1], [1], [2], [0, 0, 0, 1, 1, 2], [0], [0]>} : vector<2x1x8xbf16>, vector<2x8x20xbf16>, vector<2x1x20xf32> -> vector<2x1x20xf32>
      "tpu.trace_stop"() : () -> ()
      %22 = arith.addf %19, %21 : vector<2x1x20xf32>
      %c0_17 = arith.constant 0 : index
      %c0_18 = arith.constant 0 : index
      %c0_19 = arith.constant 0 : index
      %23 = vector.load %arg23[%c0_17, %c0_18, %c0_19] : memref<2x1x20xf32, #tpu.memory_space<vmem>>, vector<2x1x20xf32>
      tpu.vector_store %arg23[%c0_17, %c0_18, %c0_19], %22 {strides = array<i32>} : memref<2x1x20xf32, #tpu.memory_space<vmem>>, vector<2x1x20xf32>,
      %c0_20 = arith.constant 0 : index
      %c0_21 = arith.constant 0 : index
      %c0_22 = arith.constant 0 : index
      %24 = vector.load %arg24[%c0_20, %c0_21, %c0_22] : memref<2x1x1xf32, #tpu.memory_space<vmem>>, vector<2x1x1xf32>
      %cst_23 = arith.constant dense<0.000000e+00> : vector<2x1xf32>
      %25 = vector.multi_reduction <add>, %17, %cst_23 [2] : vector<2x1x8xf32> to vector<2x1xf32>
      %26 = vector.shape_cast %25 : vector<2x1xf32> to vector<2x1x1xf32>
      %27 = arith.addf %24, %26 : vector<2x1x1xf32>
      %c0_24 = arith.constant 0 : index
      %c0_25 = arith.constant 0 : index
      %c0_26 = arith.constant 0 : index
      %28 = vector.load %arg24[%c0_24, %c0_25, %c0_26] : memref<2x1x1xf32, #tpu.memory_space<vmem>>, vector<2x1x1xf32>
      tpu.vector_store %arg24[%c0_24, %c0_25, %c0_26], %27 {strides = array<i32>} : memref<2x1x1xf32, #tpu.memory_space<vmem>>, vector<2x1x1xf32>,
    } else {
    }
    %c0_i32_6 = arith.constant 0 : i32
    %12 = arith.cmpi eq, %arg1, %c0_i32_6 : i32
    %13 = arith.extui %12 : i1 to i32
    %c0_i32_7 = arith.constant 0 : i32
    %14 = arith.cmpi ne, %13, %c0_i32_7 : i32
    scf.if %14 {
      %c0 = arith.constant 0 : index
      %c0_8 = arith.constant 0 : index
      %15 = vector.load %arg8[%c0, %c0_8] : memref<32x32xbf16, #tpu.memory_space<vmem>>, vector<32x32xbf16>
      %c0_9 = arith.constant 0 : index
      %c0_10 = arith.constant 0 : index
      %c0_11 = arith.constant 0 : index
      %16 = vector.load %arg19[%c0_9, %c0_10, %c0_11] : memref<2x1x32xf32, #tpu.memory_space<vmem>>, vector<2x1x32xf32>
      %c0_12 = arith.constant 0 : index
      %c0_13 = arith.constant 0 : index
      %c0_14 = arith.constant 0 : index
      %17 = vector.load %arg20[%c0_12, %c0_13, %c0_14] : memref<2x1x1xf32, #tpu.memory_space<vmem>>, vector<2x1x1xf32>
      %cst = arith.constant 1.000000e+00 : f32
      %18 = vector.broadcast %cst : f32 to vector<2x1x1xf32>
      %19 = arith.maximumf %17, %18 : vector<2x1x1xf32>
      %20 = vector.broadcast %19 : vector<2x1x1xf32> to vector<2x1x32xf32>
      %21 = arith.divf %16, %20 : vector<2x1x32xf32>
      %cst_15 = arith.constant dense<0.000000e+00> : vector<2x32xf32>
      %22 = vector.multi_reduction <add>, %21, %cst_15 [1] : vector<2x1x32xf32> to vector<2x32xf32>
      %23 = arith.truncf %22 : vector<2x32xf32> to vector<2x32xbf16>
      %cst_16 = arith.constant dense<0.000000e+00> : vector<2x32xf32>
      %24 = tpu.matmul %23, %15, %cst_16 {dimension_numbers = #tpu.dot_dimension_numbers<[1], [0], [0], [1], [0, 0, 1, 1], [], []>} : vector<2x32xbf16>, vector<32x32xbf16>, vector<2x32xf32> -> vector<2x32xf32>
      %c0_17 = arith.constant 0 : index
      %c0_18 = arith.constant 0 : index
      %25 = vector.load %arg9[%c0_17, %c0_18] : memref<1x32xf32, #tpu.memory_space<vmem>>, vector<1x32xf32>
      %26 = vector.broadcast %25 : vector<1x32xf32> to vector<2x32xf32>
      %27 = arith.addf %24, %26 : vector<2x32xf32>
      %cst_19 = arith.constant 0.000000e+00 : f32
      %28 = vector.broadcast %cst_19 : f32 to vector<2x32xf32>
      %29 = arith.maximumf %27, %28 : vector<2x32xf32>
      %c0_20 = arith.constant 0 : index
      %c0_21 = arith.constant 0 : index
      %30 = vector.load %arg25[%c0_20, %c0_21] : memref<2x96xf32, #tpu.memory_space<vmem>>, vector<2x32xf32>
      tpu.vector_store %arg25[%c0_20, %c0_21], %29 {strides = array<i32>} : memref<2x96xf32, #tpu.memory_space<vmem>>, vector<2x32xf32>,
      %c0_22 = arith.constant 0 : index
      %c0_23 = arith.constant 0 : index
      %31 = vector.load %arg10[%c0_22, %c0_23] : memref<16x32xbf16, #tpu.memory_space<vmem>>, vector<16x32xbf16>
      %c0_24 = arith.constant 0 : index
      %c0_25 = arith.constant 0 : index
      %c0_26 = arith.constant 0 : index
      %32 = vector.load %arg21[%c0_24, %c0_25, %c0_26] : memref<2x1x16xf32, #tpu.memory_space<vmem>>, vector<2x1x16xf32>
      %c0_27 = arith.constant 0 : index
      %c0_28 = arith.constant 0 : index
      %c0_29 = arith.constant 0 : index
      %33 = vector.load %arg22[%c0_27, %c0_28, %c0_29] : memref<2x1x1xf32, #tpu.memory_space<vmem>>, vector<2x1x1xf32>
      %cst_30 = arith.constant 1.000000e+00 : f32
      %34 = vector.broadcast %cst_30 : f32 to vector<2x1x1xf32>
      %35 = arith.maximumf %33, %34 : vector<2x1x1xf32>
      %36 = vector.broadcast %35 : vector<2x1x1xf32> to vector<2x1x16xf32>
      %37 = arith.divf %32, %36 : vector<2x1x16xf32>
      %cst_31 = arith.constant dense<0.000000e+00> : vector<2x16xf32>
      %38 = vector.multi_reduction <add>, %37, %cst_31 [1] : vector<2x1x16xf32> to vector<2x16xf32>
      %39 = arith.truncf %38 : vector<2x16xf32> to vector<2x16xbf16>
      %cst_32 = arith.constant dense<0.000000e+00> : vector<2x32xf32>
      %40 = tpu.matmul %39, %31, %cst_32 {dimension_numbers = #tpu.dot_dimension_numbers<[1], [0], [0], [1], [0, 0, 1, 1], [], []>} : vector<2x16xbf16>, vector<16x32xbf16>, vector<2x32xf32> -> vector<2x32xf32>
      %c0_33 = arith.constant 0 : index
      %c0_34 = arith.constant 0 : index
      %41 = vector.load %arg11[%c0_33, %c0_34] : memref<1x32xf32, #tpu.memory_space<vmem>>, vector<1x32xf32>
      %42 = vector.broadcast %41 : vector<1x32xf32> to vector<2x32xf32>
      %43 = arith.addf %40, %42 : vector<2x32xf32>
      %cst_35 = arith.constant 0.000000e+00 : f32
      %44 = vector.broadcast %cst_35 : f32 to vector<2x32xf32>
      %45 = arith.maximumf %43, %44 : vector<2x32xf32>
      %c0_36 = arith.constant 0 : index
      %c32 = arith.constant 32 : index
      %46 = vector.load %arg25[%c0_36, %c32] : memref<2x96xf32, #tpu.memory_space<vmem>>, vector<2x32xf32>
      tpu.vector_store %arg25[%c0_36, %c32], %45 {strides = array<i32>} : memref<2x96xf32, #tpu.memory_space<vmem>>, vector<2x32xf32>,
      %c0_37 = arith.constant 0 : index
      %c0_38 = arith.constant 0 : index
      %47 = vector.load %arg12[%c0_37, %c0_38] : memref<20x32xbf16, #tpu.memory_space<vmem>>, vector<20x32xbf16>
      %c0_39 = arith.constant 0 : index
      %c0_40 = arith.constant 0 : index
      %c0_41 = arith.constant 0 : index
      %48 = vector.load %arg23[%c0_39, %c0_40, %c0_41] : memref<2x1x20xf32, #tpu.memory_space<vmem>>, vector<2x1x20xf32>
      %c0_42 = arith.constant 0 : index
      %c0_43 = arith.constant 0 : index
      %c0_44 = arith.constant 0 : index
      %49 = vector.load %arg24[%c0_42, %c0_43, %c0_44] : memref<2x1x1xf32, #tpu.memory_space<vmem>>, vector<2x1x1xf32>
      %cst_45 = arith.constant 1.000000e+00 : f32
      %50 = vector.broadcast %cst_45 : f32 to vector<2x1x1xf32>
      %51 = arith.maximumf %49, %50 : vector<2x1x1xf32>
      %52 = vector.broadcast %51 : vector<2x1x1xf32> to vector<2x1x20xf32>
      %53 = arith.divf %48, %52 : vector<2x1x20xf32>
      %cst_46 = arith.constant dense<0.000000e+00> : vector<2x20xf32>
      %54 = vector.multi_reduction <add>, %53, %cst_46 [1] : vector<2x1x20xf32> to vector<2x20xf32>
      %55 = arith.truncf %54 : vector<2x20xf32> to vector<2x20xbf16>
      %cst_47 = arith.constant dense<0.000000e+00> : vector<2x32xf32>
      %56 = tpu.matmul %55, %47, %cst_47 {dimension_numbers = #tpu.dot_dimension_numbers<[1], [0], [0], [1], [0, 0, 1, 1], [], []>} : vector<2x20xbf16>, vector<20x32xbf16>, vector<2x32xf32> -> vector<2x32xf32>
      %c0_48 = arith.constant 0 : index
      %c0_49 = arith.constant 0 : index
      %57 = vector.load %arg13[%c0_48, %c0_49] : memref<1x32xf32, #tpu.memory_space<vmem>>, vector<1x32xf32>
      %58 = vector.broadcast %57 : vector<1x32xf32> to vector<2x32xf32>
      %59 = arith.addf %56, %58 : vector<2x32xf32>
      %cst_50 = arith.constant 0.000000e+00 : f32
      %60 = vector.broadcast %cst_50 : f32 to vector<2x32xf32>
      %61 = arith.maximumf %59, %60 : vector<2x32xf32>
      %c0_51 = arith.constant 0 : index
      %c64 = arith.constant 64 : index
      %62 = vector.load %arg25[%c0_51, %c64] : memref<2x96xf32, #tpu.memory_space<vmem>>, vector<2x32xf32>
      tpu.vector_store %arg25[%c0_51, %c64], %61 {strides = array<i32>} : memref<2x96xf32, #tpu.memory_space<vmem>>, vector<2x32xf32>,
      %c0_52 = arith.constant 0 : index
      %c0_53 = arith.constant 0 : index
      %63 = vector.load %arg25[%c0_52, %c0_53] : memref<2x96xf32, #tpu.memory_space<vmem>>, vector<2x96xf32>
      %c0_54 = arith.constant 0 : index
      %c0_55 = arith.constant 0 : index
      %64 = vector.load %arg14[%c0_54, %c0_55] : memref<96x64xf32, #tpu.memory_space<vmem>>, vector<96x64xf32>
      %cst_56 = arith.constant dense<0.000000e+00> : vector<2x64xf32>
      %65 = tpu.matmul %63, %64, %cst_56 {dimension_numbers = #tpu.dot_dimension_numbers<[1], [0], [0], [1], [0, 0, 1, 1], [], []>} : vector<2x96xf32>, vector<96x64xf32>, vector<2x64xf32> -> vector<2x64xf32>
      %c0_57 = arith.constant 0 : index
      %c0_58 = arith.constant 0 : index
      %66 = vector.load %arg15[%c0_57, %c0_58] : memref<1x64xf32, #tpu.memory_space<vmem>>, vector<1x64xf32>
      %67 = vector.broadcast %66 : vector<1x64xf32> to vector<2x64xf32>
      %68 = arith.addf %65, %67 : vector<2x64xf32>
      %cst_59 = arith.constant 0.000000e+00 : f32
      %69 = vector.broadcast %cst_59 : f32 to vector<2x64xf32>
      %70 = arith.maximumf %68, %69 : vector<2x64xf32>
      %c0_60 = arith.constant 0 : index
      %c0_61 = arith.constant 0 : index
      %71 = vector.load %arg16[%c0_60, %c0_61] : memref<64x128xf32, #tpu.memory_space<vmem>>, vector<64x128xf32>
      %cst_62 = arith.constant dense<0.000000e+00> : vector<2x128xf32>
      %72 = tpu.matmul %70, %71, %cst_62 {dimension_numbers = #tpu.dot_dimension_numbers<[1], [0], [0], [1], [0, 0, 1, 1], [], []>} : vector<2x64xf32>, vector<64x128xf32>, vector<2x128xf32> -> vector<2x128xf32>
      %c0_63 = arith.constant 0 : index
      %c0_64 = arith.constant 0 : index
      %73 = vector.load %arg17[%c0_63, %c0_64] : memref<1x128xf32, #tpu.memory_space<vmem>>, vector<1x128xf32>
      %74 = vector.broadcast %73 : vector<1x128xf32> to vector<2x128xf32>
      %75 = arith.addf %72, %74 : vector<2x128xf32>
      %c0_65 = arith.constant 0 : index
      %c0_66 = arith.constant 0 : index
      %76 = vector.load %arg18[%c0_65, %c0_66] : memref<2x128xf32, #tpu.memory_space<vmem>>, vector<2x128xf32>
      tpu.vector_store %arg18[%c0_65, %c0_66], %75 {strides = array<i32>} : memref<2x128xf32, #tpu.memory_space<vmem>>, vector<2x128xf32>,
    } else {
    }
    return
  }
  func.func @transform_0(%arg0: i32, %arg1: i32) -> (i32, i32, i32) {
    %c0_i32 = arith.constant 0 : i32
    %0 = arith.minsi %arg1, %c0_i32 : i32
    %c0_i32_0 = arith.constant 0 : i32
    %c0_i32_1 = arith.constant 0 : i32
    return %arg0, %0, %c0_i32_0 : i32, i32, i32
  }
  func.func @transform_1(%arg0: i32, %arg1: i32) -> (i32, i32, i32) {
    %c0_i32 = arith.constant 0 : i32
    %0 = arith.minsi %arg1, %c0_i32 : i32
    %c0_i32_0 = arith.constant 0 : i32
    %c0_i32_1 = arith.constant 0 : i32
    return %arg0, %c0_i32_0, %0 : i32, i32, i32
  }
  func.func @transform_2(%arg0: i32, %arg1: i32) -> (i32, i32, i32) {
    %c0_i32 = arith.constant 0 : i32
    %0 = arith.minsi %arg1, %c0_i32 : i32
    %c0_i32_0 = arith.constant 0 : i32
    %c0_i32_1 = arith.constant 0 : i32
    return %arg0, %0, %c0_i32_0 : i32, i32, i32
  }
  func.func @transform_3(%arg0: i32, %arg1: i32) -> (i32, i32, i32) {
    %c0_i32 = arith.constant 0 : i32
    %0 = arith.minsi %arg1, %c0_i32 : i32
    %c0_i32_0 = arith.constant 0 : i32
    %c0_i32_1 = arith.constant 0 : i32
    return %arg0, %c0_i32_0, %0 : i32, i32, i32
  }
  func.func @transform_4(%arg0: i32, %arg1: i32) -> (i32, i32, i32) {
    %c0_i32 = arith.constant 0 : i32
    %0 = arith.minsi %arg1, %c0_i32 : i32
    %c0_i32_0 = arith.constant 0 : i32
    %c0_i32_1 = arith.constant 0 : i32
    return %arg0, %0, %c0_i32_0 : i32, i32, i32
  }
  func.func @transform_5(%arg0: i32, %arg1: i32) -> (i32, i32, i32) {
    %c0_i32 = arith.constant 0 : i32
    %0 = arith.minsi %arg1, %c0_i32 : i32
    %c0_i32_0 = arith.constant 0 : i32
    %c0_i32_1 = arith.constant 0 : i32
    return %arg0, %c0_i32_0, %0 : i32, i32, i32
  }
  func.func @transform_6(%arg0: i32, %arg1: i32) -> (i32, i32) {
    %c0_i32 = arith.constant 0 : i32
    %c0_i32_0 = arith.constant 0 : i32
    %c0_i32_1 = arith.constant 0 : i32
    return %c0_i32, %c0_i32_0 : i32, i32
  }
  func.func @transform_7(%arg0: i32, %arg1: i32) -> (i32, i32) {
    %c0_i32 = arith.constant 0 : i32
    %c0_i32_0 = arith.constant 0 : i32
    %c0_i32_1 = arith.constant 0 : i32
    return %c0_i32, %c0_i32_0 : i32, i32
  }
  func.func @transform_8(%arg0: i32, %arg1: i32) -> (i32, i32) {
    %c0_i32 = arith.constant 0 : i32
    %c0_i32_0 = arith.constant 0 : i32
    %c0_i32_1 = arith.constant 0 : i32
    return %c0_i32, %c0_i32_0 : i32, i32
  }
  func.func @transform_9(%arg0: i32, %arg1: i32) -> (i32, i32) {
    %c0_i32 = arith.constant 0 : i32
    %c0_i32_0 = arith.constant 0 : i32
    %c0_i32_1 = arith.constant 0 : i32
    return %c0_i32, %c0_i32_0 : i32, i32
  }
  func.func @transform_10(%arg0: i32, %arg1: i32) -> (i32, i32) {
    %c0_i32 = arith.constant 0 : i32
    %c0_i32_0 = arith.constant 0 : i32
    %c0_i32_1 = arith.constant 0 : i32
    return %c0_i32, %c0_i32_0 : i32, i32
  }
  func.func @transform_11(%arg0: i32, %arg1: i32) -> (i32, i32) {
    %c0_i32 = arith.constant 0 : i32
    %c0_i32_0 = arith.constant 0 : i32
    %c0_i32_1 = arith.constant 0 : i32
    return %c0_i32, %c0_i32_0 : i32, i32
  }
  func.func @transform_12(%arg0: i32, %arg1: i32) -> (i32, i32) {
    %c0_i32 = arith.constant 0 : i32
    %c0_i32_0 = arith.constant 0 : i32
    %c0_i32_1 = arith.constant 0 : i32
    return %c0_i32, %c0_i32_0 : i32, i32
  }
  func.func @transform_13(%arg0: i32, %arg1: i32) -> (i32, i32) {
    %c0_i32 = arith.constant 0 : i32
    %c0_i32_0 = arith.constant 0 : i32
    %c0_i32_1 = arith.constant 0 : i32
    return %c0_i32, %c0_i32_0 : i32, i32
  }
  func.func @transform_14(%arg0: i32, %arg1: i32) -> (i32, i32) {
    %c0_i32 = arith.constant 0 : i32
    %c0_i32_0 = arith.constant 0 : i32
    %c0_i32_1 = arith.constant 0 : i32
    return %c0_i32, %c0_i32_0 : i32, i32
  }
  func.func @transform_15(%arg0: i32, %arg1: i32) -> (i32, i32) {
    %c0_i32 = arith.constant 0 : i32
    %c0_i32_0 = arith.constant 0 : i32
    %c0_i32_1 = arith.constant 0 : i32
    return %c0_i32, %c0_i32_0 : i32, i32
  }
  func.func @transform_16(%arg0: i32, %arg1: i32) -> (i32, i32) {
    %c0_i32 = arith.constant 0 : i32
    %c0_i32_0 = arith.constant 0 : i32
    return %arg0, %c0_i32 : i32, i32
  }
}

</mosaic_0001>

<llo_original>
// kernel: tpu_custom_call.1
$region0: #{tpu_custom_call.1}
  #allocation0 [shape = 'u32[]', space=smem, size = 0x4, offset = 0x4, fixed_abs, tag = 'smem constant byte address 0x4 - core index']
  #allocation1 [shape = 'u32[144,128]{1,0:T(1,128)}', space=vmem, size = 0x12000, scoped, tag = 'internal scratch']
  #allocation2 [shape = 'f32[2,1,32]{2,1,0:T(1,128)}', space=vmem, size = 0x400, scoped, tag = 'scratch operand']
  #allocation3 [shape = 'f32[2,1,1]{2,1,0:T(1,128)}', space=vmem, size = 0x400, scoped, tag = 'scratch operand']
  #allocation4 [shape = 'f32[2,1,16]{2,1,0:T(1,128)}', space=vmem, size = 0x400, scoped, tag = 'scratch operand']
  #allocation5 [shape = 'f32[2,1,1]{2,1,0:T(1,128)}', space=vmem, size = 0x400, scoped, tag = 'scratch operand']
  #allocation6 [shape = 'f32[2,1,20]{2,1,0:T(1,128)}', space=vmem, size = 0x400, scoped, tag = 'scratch operand']
  #allocation7 [shape = 'f32[2,1,1]{2,1,0:T(1,128)}', space=vmem, size = 0x400, scoped, tag = 'scratch operand']
  #allocation8 [shape = 'f32[2,96]{1,0:T(2,128)}', space=vmem, size = 0x400, scoped, tag = 'scratch operand']
  %s0 = inlined_call_operand.vmem [shape: bf16[2,8,32], index: 0, kind: input, shape index: {}]
  %s1 = inlined_call_operand.vmem [shape: f32[2,1,8], index: 1, kind: input, shape index: {}]
  %s2 = inlined_call_operand.vmem [shape: bf16[2,8,16], index: 2, kind: input, shape index: {}]
  %s3 = inlined_call_operand.vmem [shape: f32[2,1,8], index: 3, kind: input, shape index: {}]
  %s4 = inlined_call_operand.vmem [shape: bf16[2,8,20], index: 4, kind: input, shape index: {}]
  %s5 = inlined_call_operand.vmem [shape: f32[2,1,8], index: 5, kind: input, shape index: {}]
  %s6 = inlined_call_operand.vmem [shape: bf16[32,32], index: 6, kind: input, shape index: {}]
  %s7 = inlined_call_operand.vmem [shape: f32[1,32], index: 7, kind: input, shape index: {}]
  %s8 = inlined_call_operand.vmem [shape: bf16[16,32], index: 8, kind: input, shape index: {}]
  %s9 = inlined_call_operand.vmem [shape: f32[1,32], index: 9, kind: input, shape index: {}]
  %s10 = inlined_call_operand.vmem [shape: bf16[20,32], index: 10, kind: input, shape index: {}]
  %s11 = inlined_call_operand.vmem [shape: f32[1,32], index: 11, kind: input, shape index: {}]
  %s12 = inlined_call_operand.vmem [shape: f32[96,64], index: 12, kind: input, shape index: {}]
  %s13 = inlined_call_operand.vmem [shape: f32[1,64], index: 13, kind: input, shape index: {}]
  %s14 = inlined_call_operand.vmem [shape: f32[64,128], index: 14, kind: input, shape index: {}]
  %s15 = inlined_call_operand.vmem [shape: f32[1,128], index: 15, kind: input, shape index: {}]
  %s16 = inlined_call_operand.hbm [shape: f32[2,128], index: 16, kind: output, shape index: {}]
  %s17 = sld [smem:[#allocation0]]
  $region86: #{tpu_custom_call.1} parent=0
    _
  %s19 = ssub.s32 1, %s17
  %s20 = scalar_select 0, %s19, %s17
  $region1: #{tpu_custom_call.1} parent=0
    #allocation9 [shape = 'u8[1024]{0}', space=vmem, size = 0x400, scoped, tag = 'output window, operand 0, single buffered']
    #allocation10 [shape = 's32[1]{0}', space=sflag, size = 0x4, scoped, tag = 'scoped memory for tpu_custom_call.1']
    %21 = vsyncpa [#allocation10], 0
    // Predicated region
    $region2: #{tpu_custom_call.1} parent=1 // pred_check
      _
    $region3: #{tpu_custom_call.1} parent=1 // pred_check_branch
      %23 = sbr.rel (0) target = $region5
    $region4: #{tpu_custom_call.1} parent=1 // pred_region
      _
    $region5: #{tpu_custom_call.1} parent=1 // pred_fallthru
      _
    // Predicated region
    $region6: #{tpu_custom_call.1} parent=1 // pred_check
      _
    $region7: #{tpu_custom_call.1} parent=1 // pred_check_branch
      %25 = sbr.rel (0) target = $region9
    $region8: #{tpu_custom_call.1} parent=1 // pred_region
      _
    $region9: #{tpu_custom_call.1} parent=1 // pred_fallthru
      _
    // Predicated region
    $region10: #{tpu_custom_call.1} parent=1 // pred_check
      _
    $region11: #{tpu_custom_call.1} parent=1 // pred_check_branch
      %27 = sbr.rel (0) target = $region13
    $region12: #{tpu_custom_call.1} parent=1 // pred_region
      _
    $region13: #{tpu_custom_call.1} parent=1 // pred_fallthru
      _
    // Predicated region
    $region14: #{tpu_custom_call.1} parent=1 // pred_check
      _
    $region15: #{tpu_custom_call.1} parent=1 // pred_check_branch
      %29 = sbr.rel (0) target = $region17
    $region16: #{tpu_custom_call.1} parent=1 // pred_region
      _
    $region17: #{tpu_custom_call.1} parent=1 // pred_fallthru
      _
    // Predicated region
    $region18: #{tpu_custom_call.1} parent=1 // pred_check
      _
    $region19: #{tpu_custom_call.1} parent=1 // pred_check_branch
      %31 = sbr.rel (0) target = $region21
    $region20: #{tpu_custom_call.1} parent=1 // pred_region
      _
    $region21: #{tpu_custom_call.1} parent=1 // pred_fallthru
      _
    // Predicated region
    $region22: #{tpu_custom_call.1} parent=1 // pred_check
      _
    $region23: #{tpu_custom_call.1} parent=1 // pred_check_branch
      %33 = sbr.rel (0) target = $region25
    $region24: #{tpu_custom_call.1} parent=1 // pred_region
      _
    $region25: #{tpu_custom_call.1} parent=1 // pred_fallthru
      _
    // Predicated region
    $region26: #{tpu_custom_call.1} parent=1 // pred_check
      _
    $region27: #{tpu_custom_call.1} parent=1 // pred_check_branch
      %35 = sbr.rel (0) target = $region29
    $region28: #{tpu_custom_call.1} parent=1 // pred_region
      _
    $region29: #{tpu_custom_call.1} parent=1 // pred_fallthru
      _
    // Predicated region
    $region30: #{tpu_custom_call.1} parent=1 // pred_check
      _
    $region31: #{tpu_custom_call.1} parent=1 // pred_check_branch
      %37 = sbr.rel (0) target = $region33
    $region32: #{tpu_custom_call.1} parent=1 // pred_region
      _
    $region33: #{tpu_custom_call.1} parent=1 // pred_fallthru
      _
    // Predicated region
    $region34: #{tpu_custom_call.1} parent=1 // pred_check
      _
    $region35: #{tpu_custom_call.1} parent=1 // pred_check_branch
      %39 = sbr.rel (0) target = $region37
    $region36: #{tpu_custom_call.1} parent=1 // pred_region
      _
    $region37: #{tpu_custom_call.1} parent=1 // pred_fallthru
      _
    // Predicated region
    $region38: #{tpu_custom_call.1} parent=1 // pred_check
      _
    $region39: #{tpu_custom_call.1} parent=1 // pred_check_branch
      %41 = sbr.rel (0) target = $region41
    $region40: #{tpu_custom_call.1} parent=1 // pred_region
      _
    $region41: #{tpu_custom_call.1} parent=1 // pred_fallthru
      _
    // Predicated region
    $region42: #{tpu_custom_call.1} parent=1 // pred_check
      _
    $region43: #{tpu_custom_call.1} parent=1 // pred_check_branch
      %43 = sbr.rel (0) target = $region45
    $region44: #{tpu_custom_call.1} parent=1 // pred_region
      _
    $region45: #{tpu_custom_call.1} parent=1 // pred_fallthru
      _
    // Predicated region
    $region46: #{tpu_custom_call.1} parent=1 // pred_check
      _
    $region47: #{tpu_custom_call.1} parent=1 // pred_check_branch
      %45 = sbr.rel (0) target = $region49
    $region48: #{tpu_custom_call.1} parent=1 // pred_region
      _
    $region49: #{tpu_custom_call.1} parent=1 // pred_fallthru
      _
    // Predicated region
    $region50: #{tpu_custom_call.1} parent=1 // pred_check
      _
    $region51: #{tpu_custom_call.1} parent=1 // pred_check_branch
      %47 = sbr.rel (0) target = $region53
    $region52: #{tpu_custom_call.1} parent=1 // pred_region
      _
    $region53: #{tpu_custom_call.1} parent=1 // pred_fallthru
      _
    // Predicated region
    $region54: #{tpu_custom_call.1} parent=1 // pred_check
      _
    $region55: #{tpu_custom_call.1} parent=1 // pred_check_branch
      %49 = sbr.rel (0) target = $region57
    $region56: #{tpu_custom_call.1} parent=1 // pred_region
      _
    $region57: #{tpu_custom_call.1} parent=1 // pred_fallthru
      _
    // Predicated region
    $region58: #{tpu_custom_call.1} parent=1 // pred_check
      _
    $region59: #{tpu_custom_call.1} parent=1 // pred_check_branch
      %51 = sbr.rel (0) target = $region61
    $region60: #{tpu_custom_call.1} parent=1 // pred_region
      _
    $region61: #{tpu_custom_call.1} parent=1 // pred_fallthru
      _
    // Predicated region
    $region62: #{tpu_custom_call.1} parent=1 // pred_check
      _
    $region63: #{tpu_custom_call.1} parent=1 // pred_check_branch
      %53 = sbr.rel (0) target = $region65
    $region64: #{tpu_custom_call.1} parent=1 // pred_region
      _
    $region65: #{tpu_custom_call.1} parent=1 // pred_fallthru
      _
    %p55 = scmp.eq.s32.totalorder 0, 0
    // Predicated region
    $region66: #{tpu_custom_call.1} parent=1 // pred_check
      %p56 = pneg %p55
    $region67: #{tpu_custom_call.1} parent=1 // pred_check_branch
      %58 = sbr.rel (%p56) target = $region69
    $region68: #{tpu_custom_call.1} parent=1 // pred_region
      %vm59 = vcmask 253952
      %60 = vst.msk [vmem:[#allocation2] sm:$0x1] %vm59, 0.0
      %61 = vst.msk [vmem:[#allocation2 + $0x1] sm:$0x1] %vm59, 0.0
      %vm62 = vcmask 0
      %63 = vst.msk [vmem:[#allocation3] sm:$0x1] %vm62, 0.0
      %64 = vst.msk [vmem:[#allocation3 + $0x1] sm:$0x1] %vm62, 0.0
      %vm65 = vcmask 122880
      %66 = vst.msk [vmem:[#allocation4] sm:$0x1] %vm65, 0.0
      %67 = vst.msk [vmem:[#allocation4 + $0x1] sm:$0x1] %vm65, 0.0
      %68 = vst.msk [vmem:[#allocation5] sm:$0x1] %vm62, 0.0
      %69 = vst.msk [vmem:[#allocation5 + $0x1] sm:$0x1] %vm62, 0.0
      %vm70 = vcmask 155648
      %71 = vst.msk [vmem:[#allocation6] sm:$0x1] %vm70, 0.0
      %72 = vst.msk [vmem:[#allocation6 + $0x1] sm:$0x1] %vm70, 0.0
      %73 = vst.msk [vmem:[#allocation7] sm:$0x1] %vm62, 0.0
      %74 = vst.msk [vmem:[#allocation7 + $0x1] sm:$0x1] %vm62, 0.0
    $region69: #{tpu_custom_call.1} parent=1 // pred_fallthru
      _
    %p75 = scmp.lt.s32.totalorder 0, 1
    // Predicated region
    $region70: #{tpu_custom_call.1} parent=1 // pred_check
      %p76 = pneg %p75
    $region71: #{tpu_custom_call.1} parent=1 // pred_check_branch
      %78 = sbr.rel (%p76) target = $region73
    $region72: #{tpu_custom_call.1} parent=1 // pred_region
      %v79 = vld [vmem:[%s1] sm:$0x1]
      %v80 = vld [vmem:[%s1 + $0x1] sm:$0x1]
      %v81 = vsub.f32 1.0, %v79
      %v82 = vsub.f32 1.0, %v80
      %v83 = vld [vmem:[%s0] sm:$0xf]
      %v84 = vld [vmem:[%s0 + $0x4] sm:$0xf]
      %v85 = vld [vmem:[#allocation2] sm:$0x1]
      %v86 = vld [vmem:[#allocation2 + $0x1] sm:$0x1]
      %v87 = vpack.c.bf16 %v81, %v81
      %v88 = vpack.c.bf16 %v82, %v82
      %vm89 = vcmask 64512
      %v91 = vsel %vm89, %v87, 0
      %vm93 = vcmask 1043456
      %v95 = vsel %vm93, %v83, 0
      %97 = vmatprep.subr.bf16.mxu0 0
      %98 = vmatpush1.bf16.msra.mxu0 %v95
      %99 = vmatprep.subr.bf16.mxu0 0
      %100 = vmatpush1.bf16.msra.mxu0 0
      %101 = vmatprep.subr.bf16.mxu0 0
      %102 = vmatpush1.bf16.msra.mxu0 0
      %103 = vmatprep.subr.bf16.mxu0 0
      %104 = vmatpush1.bf16.msra.mxu0 0
      %105 = vmatprep.subr.bf16.mxu0 0
      %106 = vmatpush1.bf16.msra.mxu0 0
      %107 = vmatprep.subr.bf16.mxu0 0
      %108 = vmatpush1.bf16.msra.mxu0 0
      %109 = vmatprep.subr.bf16.mxu0 0
      %110 = vmatpush1.bf16.msra.mxu0 0
      %111 = vmatprep.subr.bf16.mxu0 0
      %112 = vmatpush1.bf16.msra.mxu0 0
      %113 = vmatprep.subr.bf16.mxu0 0
      %114 = vmatpush1.bf16.msra.mxu0 0
      %115 = vmatprep.subr.bf16.mxu0 0
      %116 = vmatpush1.bf16.msra.mxu0 0
      %117 = vmatprep.subr.bf16.mxu0 0
      %118 = vmatpush1.bf16.msra.mxu0 0
      %119 = vmatprep.subr.bf16.mxu0 0
      %120 = vmatpush1.bf16.msra.mxu0 0
      %121 = vmatprep.subr.bf16.mxu0 0
      %122 = vmatpush1.bf16.msra.mxu0 0
      %123 = vmatprep.subr.bf16.mxu0 0
      %124 = vmatpush1.bf16.msra.mxu0 0
      %125 = vmatprep.subr.bf16.mxu0 0
      %126 = vmatpush1.bf16.msra.mxu0 0
      %127 = vmatprep.subr.bf16.mxu0 0
      %128 = vmatpush1.bf16.msra.mxu0 0
      %129 = vmatprep.mubr.bf16.mxu0 0
      %130 = vmatmul.mubr.bf16.gmra.mrb[0].mxu0 %v91
      %v131 = vpop.f32.mrb[0].mxu0
      %v132 = vadd.f32 0.0, %v131
      %v133 = vpop.f32.mrb[0].mxu0
      %v134 = vpop.f32.mrb[0].mxu0
      %v135 = vpop.f32.mrb[0].mxu0
      %136 = vdwg.mxu0
      %v138 = vsel %vm89, %v88, 0
      %v141 = vsel %vm93, %v84, 0
      %143 = vmatprep.subr.bf16.mxu0 0
      %144 = vmatpush1.bf16.msra.mxu0 %v141
      %145 = vmatprep.subr.bf16.mxu0 0
      %146 = vmatpush1.bf16.msra.mxu0 0
      %147 = vmatprep.subr.bf16.mxu0 0
      %148 = vmatpush1.bf16.msra.mxu0 0
      %149 = vmatprep.subr.bf16.mxu0 0
      %150 = vmatpush1.bf16.msra.mxu0 0
      %151 = vmatprep.subr.bf16.mxu0 0
      %152 = vmatpush1.bf16.msra.mxu0 0
      %153 = vmatprep.subr.bf16.mxu0 0
      %154 = vmatpush1.bf16.msra.mxu0 0
      %155 = vmatprep.subr.bf16.mxu0 0
      %156 = vmatpush1.bf16.msra.mxu0 0
      %157 = vmatprep.subr.bf16.mxu0 0
      %158 = vmatpush1.bf16.msra.mxu0 0
      %159 = vmatprep.subr.bf16.mxu0 0
      %160 = vmatpush1.bf16.msra.mxu0 0
      %161 = vmatprep.subr.bf16.mxu0 0
      %162 = vmatpush1.bf16.msra.mxu0 0
      %163 = vmatprep.subr.bf16.mxu0 0
      %164 = vmatpush1.bf16.msra.mxu0 0
      %165 = vmatprep.subr.bf16.mxu0 0
      %166 = vmatpush1.bf16.msra.mxu0 0
      %167 = vmatprep.subr.bf16.mxu0 0
      %168 = vmatpush1.bf16.msra.mxu0 0
      %169 = vmatprep.subr.bf16.mxu0 0
      %170 = vmatpush1.bf16.msra.mxu0 0
      %171 = vmatprep.subr.bf16.mxu0 0
      %172 = vmatpush1.bf16.msra.mxu0 0
      %173 = vmatprep.subr.bf16.mxu0 0
      %174 = vmatpush1.bf16.msra.mxu0 0
      %175 = vmatprep.mubr.bf16.mxu0 0
      %176 = vmatmul.mubr.bf16.gmra.mrb[0].mxu0 %v138
      %v177 = vpop.f32.mrb[0].mxu0
      %v178 = vadd.f32 0.0, %v177
      %v179 = vpop.f32.mrb[0].mxu0
      %v180 = vpop.f32.mrb[0].mxu0
      %v181 = vpop.f32.mrb[0].mxu0
      %182 = vdwg.mxu0
      %v183 = vadd.f32 %v85, %v132
      %v184 = vadd.f32 %v86, %v178
      %vm185 = vcmask 253952
      %186 = vst.msk [vmem:[#allocation2] sm:$0x1] %vm185, %v183
      %187 = vst.msk [vmem:[#allocation2 + $0x1] sm:$0x1] %vm185, %v184
      %v188 = vld [vmem:[#allocation3] sm:$0x1]
      %v189 = vld [vmem:[#allocation3 + $0x1] sm:$0x1]
      %vm190 = vcmask 57344
      %v191 = vsel %vm190, %v81, 0.0
      %192 = vadd.xlane.f32.xlu0 %v191
      %v193 = vpop.xlane.xlu0 %192
      %v194 = vsel %vm190, %v82, 0.0
      %195 = vadd.xlane.f32.xlu0 %v194
      %v196 = vpop.xlane.xlu0 %195
      %v197 = vadd.f32 %v188, %v193
      %v198 = vadd.f32 %v189, %v196
      %vm199 = vcmask 0
      %200 = vst.msk [vmem:[#allocation3] sm:$0x1] %vm199, %v197
      %201 = vst.msk [vmem:[#allocation3 + $0x1] sm:$0x1] %vm199, %v198
      %v202 = vld [vmem:[%s3] sm:$0x1]
      %v203 = vld [vmem:[%s3 + $0x1] sm:$0x1]
      %v204 = vsub.f32 1.0, %v202
      %v205 = vsub.f32 1.0, %v203
      %v206 = vld [vmem:[%s2] sm:$0xf]
      %v207 = vld [vmem:[%s2 + $0x4] sm:$0xf]
      %v208 = vld [vmem:[#allocation4] sm:$0x1]
      %v209 = vld [vmem:[#allocation4 + $0x1] sm:$0x1]
      %v210 = vpack.c.bf16 %v204, %v204
      %v211 = vpack.c.bf16 %v205, %v205
      %v213 = vsel %vm89, %v210, 0
      %v216 = vsel %vm93, %v206, 0
      %218 = vmatprep.subr.bf16.mxu0 0
      %219 = vmatpush1.bf16.msra.mxu0 %v216
      %220 = vmatprep.subr.bf16.mxu0 0
      %221 = vmatpush1.bf16.msra.mxu0 0
      %222 = vmatprep.subr.bf16.mxu0 0
      %223 = vmatpush1.bf16.msra.mxu0 0
      %224 = vmatprep.subr.bf16.mxu0 0
      %225 = vmatpush1.bf16.msra.mxu0 0
      %226 = vmatprep.subr.bf16.mxu0 0
      %227 = vmatpush1.bf16.msra.mxu0 0
      %228 = vmatprep.subr.bf16.mxu0 0
      %229 = vmatpush1.bf16.msra.mxu0 0
      %230 = vmatprep.subr.bf16.mxu0 0
      %231 = vmatpush1.bf16.msra.mxu0 0
      %232 = vmatprep.subr.bf16.mxu0 0
      %233 = vmatpush1.bf16.msra.mxu0 0
      %234 = vmatprep.subr.bf16.mxu0 0
      %235 = vmatpush1.bf16.msra.mxu0 0
      %236 = vmatprep.subr.bf16.mxu0 0
      %237 = vmatpush1.bf16.msra.mxu0 0
      %238 = vmatprep.subr.bf16.mxu0 0
      %239 = vmatpush1.bf16.msra.mxu0 0
      %240 = vmatprep.subr.bf16.mxu0 0
      %241 = vmatpush1.bf16.msra.mxu0 0
      %242 = vmatprep.subr.bf16.mxu0 0
      %243 = vmatpush1.bf16.msra.mxu0 0
      %244 = vmatprep.subr.bf16.mxu0 0
      %245 = vmatpush1.bf16.msra.mxu0 0
      %246 = vmatprep.subr.bf16.mxu0 0
      %247 = vmatpush1.bf16.msra.mxu0 0
      %248 = vmatprep.subr.bf16.mxu0 0
      %249 = vmatpush1.bf16.msra.mxu0 0
      %250 = vmatprep.mubr.bf16.mxu0 0
      %251 = vmatmul.mubr.bf16.gmra.mrb[0].mxu0 %v213
      %v252 = vpop.f32.mrb[0].mxu0
      %v253 = vadd.f32 0.0, %v252
      %v254 = vpop.f32.mrb[0].mxu0
      %v255 = vpop.f32.mrb[0].mxu0
      %v256 = vpop.f32.mrb[0].mxu0
      %257 = vdwg.mxu0
      %v259 = vsel %vm89, %v211, 0
      %v262 = vsel %vm93, %v207, 0
      %264 = vmatprep.subr.bf16.mxu0 0
      %265 = vmatpush1.bf16.msra.mxu0 %v262
      %266 = vmatprep.subr.bf16.mxu0 0
      %267 = vmatpush1.bf16.msra.mxu0 0
      %268 = vmatprep.subr.bf16.mxu0 0
      %269 = vmatpush1.bf16.msra.mxu0 0
      %270 = vmatprep.subr.bf16.mxu0 0
      %271 = vmatpush1.bf16.msra.mxu0 0
      %272 = vmatprep.subr.bf16.mxu0 0
      %273 = vmatpush1.bf16.msra.mxu0 0
      %274 = vmatprep.subr.bf16.mxu0 0
      %275 = vmatpush1.bf16.msra.mxu0 0
      %276 = vmatprep.subr.bf16.mxu0 0
      %277 = vmatpush1.bf16.msra.mxu0 0
      %278 = vmatprep.subr.bf16.mxu0 0
      %279 = vmatpush1.bf16.msra.mxu0 0
      %280 = vmatprep.subr.bf16.mxu0 0
      %281 = vmatpush1.bf16.msra.mxu0 0
      %282 = vmatprep.subr.bf16.mxu0 0
      %283 = vmatpush1.bf16.msra.mxu0 0
      %284 = vmatprep.subr.bf16.mxu0 0
      %285 = vmatpush1.bf16.msra.mxu0 0
      %286 = vmatprep.subr.bf16.mxu0 0
      %287 = vmatpush1.bf16.msra.mxu0 0
      %288 = vmatprep.subr.bf16.mxu0 0
      %289 = vmatpush1.bf16.msra.mxu0 0
      %290 = vmatprep.subr.bf16.mxu0 0
      %291 = vmatpush1.bf16.msra.mxu0 0
      %292 = vmatprep.subr.bf16.mxu0 0
      %293 = vmatpush1.bf16.msra.mxu0 0
      %294 = vmatprep.subr.bf16.mxu0 0
      %295 = vmatpush1.bf16.msra.mxu0 0
      %296 = vmatprep.mubr.bf16.mxu0 0
      %297 = vmatmul.mubr.bf16.gmra.mrb[0].mxu0 %v259
      %v298 = vpop.f32.mrb[0].mxu0
      %v299 = vadd.f32 0.0, %v298
      %v300 = vpop.f32.mrb[0].mxu0
      %v301 = vpop.f32.mrb[0].mxu0
      %v302 = vpop.f32.mrb[0].mxu0
      %303 = vdwg.mxu0
      %v304 = vadd.f32 %v208, %v253
      %v305 = vadd.f32 %v209, %v299
      %vm306 = vcmask 122880
      %307 = vst.msk [vmem:[#allocation4] sm:$0x1] %vm306, %v304
      %308 = vst.msk [vmem:[#allocation4 + $0x1] sm:$0x1] %vm306, %v305
      %v309 = vld [vmem:[#allocation5] sm:$0x1]
      %v310 = vld [vmem:[#allocation5 + $0x1] sm:$0x1]
      %v311 = vsel %vm190, %v204, 0.0
      %312 = vadd.xlane.f32.xlu0 %v311
      %v313 = vpop.xlane.xlu0 %312
      %v314 = vsel %vm190, %v205, 0.0
      %315 = vadd.xlane.f32.xlu0 %v314
      %v316 = vpop.xlane.xlu0 %315
      %v317 = vadd.f32 %v309, %v313
      %v318 = vadd.f32 %v310, %v316
      %319 = vst.msk [vmem:[#allocation5] sm:$0x1] %vm199, %v317
      %320 = vst.msk [vmem:[#allocation5 + $0x1] sm:$0x1] %vm199, %v318
      %v321 = vld [vmem:[%s5] sm:$0x1]
      %v322 = vld [vmem:[%s5 + $0x1] sm:$0x1]
      %v323 = vsub.f32 1.0, %v321
      %v324 = vsub.f32 1.0, %v322
      %v325 = vld [vmem:[%s4] sm:$0xf]
      %v326 = vld [vmem:[%s4 + $0x4] sm:$0xf]
      %v327 = vld [vmem:[#allocation6] sm:$0x1]
      %v328 = vld [vmem:[#allocation6 + $0x1] sm:$0x1]
      %v329 = vpack.c.bf16 %v323, %v323
      %v330 = vpack.c.bf16 %v324, %v324
      %v332 = vsel %vm89, %v329, 0
      %v335 = vsel %vm93, %v325, 0
      %337 = vmatprep.subr.bf16.mxu0 0
      %338 = vmatpush1.bf16.msra.mxu0 %v335
      %339 = vmatprep.subr.bf16.mxu0 0
      %340 = vmatpush1.bf16.msra.mxu0 0
      %341 = vmatprep.subr.bf16.mxu0 0
      %342 = vmatpush1.bf16.msra.mxu0 0
      %343 = vmatprep.subr.bf16.mxu0 0
      %344 = vmatpush1.bf16.msra.mxu0 0
      %345 = vmatprep.subr.bf16.mxu0 0
      %346 = vmatpush1.bf16.msra.mxu0 0
      %347 = vmatprep.subr.bf16.mxu0 0
      %348 = vmatpush1.bf16.msra.mxu0 0
      %349 = vmatprep.subr.bf16.mxu0 0
      %350 = vmatpush1.bf16.msra.mxu0 0
      %351 = vmatprep.subr.bf16.mxu0 0
      %352 = vmatpush1.bf16.msra.mxu0 0
      %353 = vmatprep.subr.bf16.mxu0 0
      %354 = vmatpush1.bf16.msra.mxu0 0
      %355 = vmatprep.subr.bf16.mxu0 0
      %356 = vmatpush1.bf16.msra.mxu0 0
      %357 = vmatprep.subr.bf16.mxu0 0
      %358 = vmatpush1.bf16.msra.mxu0 0
      %359 = vmatprep.subr.bf16.mxu0 0
      %360 = vmatpush1.bf16.msra.mxu0 0
      %361 = vmatprep.subr.bf16.mxu0 0
      %362 = vmatpush1.bf16.msra.mxu0 0
      %363 = vmatprep.subr.bf16.mxu0 0
      %364 = vmatpush1.bf16.msra.mxu0 0
      %365 = vmatprep.subr.bf16.mxu0 0
      %366 = vmatpush1.bf16.msra.mxu0 0
      %367 = vmatprep.subr.bf16.mxu0 0
      %368 = vmatpush1.bf16.msra.mxu0 0
      %369 = vmatprep.mubr.bf16.mxu0 0
      %370 = vmatmul.mubr.bf16.gmra.mrb[0].mxu0 %v332
      %v371 = vpop.f32.mrb[0].mxu0
      %v372 = vadd.f32 0.0, %v371
      %v373 = vpop.f32.mrb[0].mxu0
      %v374 = vpop.f32.mrb[0].mxu0
      %v375 = vpop.f32.mrb[0].mxu0
      %376 = vdwg.mxu0
      %v378 = vsel %vm89, %v330, 0
      %v381 = vsel %vm93, %v326, 0
      %383 = vmatprep.subr.bf16.mxu0 0
      %384 = vmatpush1.bf16.msra.mxu0 %v381
      %385 = vmatprep.subr.bf16.mxu0 0
      %386 = vmatpush1.bf16.msra.mxu0 0
      %387 = vmatprep.subr.bf16.mxu0 0
      %388 = vmatpush1.bf16.msra.mxu0 0
      %389 = vmatprep.subr.bf16.mxu0 0
      %390 = vmatpush1.bf16.msra.mxu0 0
      %391 = vmatprep.subr.bf16.mxu0 0
      %392 = vmatpush1.bf16.msra.mxu0 0
      %393 = vmatprep.subr.bf16.mxu0 0
      %394 = vmatpush1.bf16.msra.mxu0 0
      %395 = vmatprep.subr.bf16.mxu0 0
      %396 = vmatpush1.bf16.msra.mxu0 0
      %397 = vmatprep.subr.bf16.mxu0 0
      %398 = vmatpush1.bf16.msra.mxu0 0
      %399 = vmatprep.subr.bf16.mxu0 0
      %400 = vmatpush1.bf16.msra.mxu0 0
      %401 = vmatprep.subr.bf16.mxu0 0
      %402 = vmatpush1.bf16.msra.mxu0 0
      %403 = vmatprep.subr.bf16.mxu0 0
      %404 = vmatpush1.bf16.msra.mxu0 0
      %405 = vmatprep.subr.bf16.mxu0 0
      %406 = vmatpush1.bf16.msra.mxu0 0
      %407 = vmatprep.subr.bf16.mxu0 0
      %408 = vmatpush1.bf16.msra.mxu0 0
      %409 = vmatprep.subr.bf16.mxu0 0
      %410 = vmatpush1.bf16.msra.mxu0 0
      %411 = vmatprep.subr.bf16.mxu0 0
      %412 = vmatpush1.bf16.msra.mxu0 0
      %413 = vmatprep.subr.bf16.mxu0 0
      %414 = vmatpush1.bf16.msra.mxu0 0
      %415 = vmatprep.mubr.bf16.mxu0 0
      %416 = vmatmul.mubr.bf16.gmra.mrb[0].mxu0 %v378
      %v417 = vpop.f32.mrb[0].mxu0
      %v418 = vadd.f32 0.0, %v417
      %v419 = vpop.f32.mrb[0].mxu0
      %v420 = vpop.f32.mrb[0].mxu0
      %v421 = vpop.f32.mrb[0].mxu0
      %422 = vdwg.mxu0
      %v423 = vadd.f32 %v327, %v372
      %v424 = vadd.f32 %v328, %v418
      %vm425 = vcmask 155648
      %426 = vst.msk [vmem:[#allocation6] sm:$0x1] %vm425, %v423
      %427 = vst.msk [vmem:[#allocation6 + $0x1] sm:$0x1] %vm425, %v424
      %v428 = vld [vmem:[#allocation7] sm:$0x1]
      %v429 = vld [vmem:[#allocation7 + $0x1] sm:$0x1]
      %v430 = vsel %vm190, %v323, 0.0
      %431 = vadd.xlane.f32.xlu0 %v430
      %v432 = vpop.xlane.xlu0 %431
      %v433 = vsel %vm190, %v324, 0.0
      %434 = vadd.xlane.f32.xlu0 %v433
      %v435 = vpop.xlane.xlu0 %434
      %v436 = vadd.f32 %v428, %v432
      %v437 = vadd.f32 %v429, %v435
      %438 = vst.msk [vmem:[#allocation7] sm:$0x1] %vm199, %v436
      %439 = vst.msk [vmem:[#allocation7 + $0x1] sm:$0x1] %vm199, %v437
    $region73: #{tpu_custom_call.1} parent=1 // pred_fallthru
      _
    // Predicated region
    $region74: #{tpu_custom_call.1} parent=1 // pred_check
      %p440 = pneg %p55
    $region75: #{tpu_custom_call.1} parent=1 // pred_check_branch
      %442 = sbr.rel (%p440) target = $region77
    $region76: #{tpu_custom_call.1} parent=1 // pred_region
      %v443 = vld [vmem:[%s6] sm:$0xf]
      %v444 = vld [vmem:[%s6 + $0x4] sm:$0xf]
      %v445 = vld [vmem:[%s6 + $0x8] sm:$0xf]
      %v446 = vld [vmem:[%s6 + $0xc] sm:$0xf]
      %v447 = vld [vmem:[#allocation2] sm:$0x1]
      %v448 = vld [vmem:[#allocation2 + $0x1] sm:$0x1]
      %v449 = vld [vmem:[#allocation3] sm:$0x1]
      %v450 = vld [vmem:[#allocation3 + $0x1] sm:$0x1]
      %v451 = vmax.f32 %v449, 1.0
      %v452 = vmax.f32 %v450, 1.0
      %454 = vset.pattern.permute.xlu0 0
      %455 = vperm.xlu0 %454, %v451
      %v456 = vpop.permute.xlu0 %455
      %v458 = vlaneseq
      %v459 = vshrl.u32 %v458, 7
      %v460 = vsub.s32 0, %v459
      %v461 = vrot.slane %v456, %v460
      %463 = vset.pattern.permute.xlu0 0
      %464 = vperm.xlu0 %463, %v452
      %v465 = vpop.permute.xlu0 %464
      %v467 = vlaneseq
      %v468 = vshrl.u32 %v467, 7
      %v469 = vsub.s32 0, %v468
      %v470 = vrot.slane %v465, %v469
      %v471 = vrcp.pop %v461
      %v472 = vmul.f32 %v447, %v471
      %v473 = vrcp.pop %v470
      %v474 = vmul.f32 %v448, %v473
      %v475 = vadd.f32 %v472, 0.0
      %v476 = vadd.f32 %v474, 0.0
      %v477 = vpack.c.bf16 %v475, %v475
      %v478 = vpack.c.bf16 %v476, %v476
      %v479 = vld [vmem:[%s7] sm:$0x1]
      %v481 = vlaneseq
      %v482 = vshrl.u32 %v481, 7
      %v483 = vsub.s32 0, %v482
      %v484 = vrot.slane %v479, %v483
      %v488 = vunpack.c.l.b16 %v477
      %v489 = vunpack.c.l.b16 %v478
      %v490 = vrot.slane %v489, 7
      %vm491 = vcmask 1041409
      %v492 = vsel %vm491, %v490, %v488
      %v493 = vpack.c.b16 %v492, %v492
      %v498 = vunpack.c.l.b16 %v443
      %v499 = vunpack.c.l.b16 %v444
      %v500 = vunpack.c.l.b16 %v445
      %v501 = vunpack.c.l.b16 %v446
      %v502 = vpack.c.b16 %v499, %v498
      %v503 = vpack.c.b16 %v501, %v500
      %vm506 = vcmask 261120
      %v508 = vsel %vm506, %v493, 0
      %510 = vmatprep.subr.bf16.mxu0 0
      %511 = vmatpush1.bf16.msra.mxu0 %v502
      %512 = vmatprep.subr.bf16.mxu0 0
      %513 = vmatpush1.bf16.msra.mxu0 %v503
      %514 = vmatprep.subr.bf16.mxu0 0
      %515 = vmatpush1.bf16.msra.mxu0 0
      %516 = vmatprep.subr.bf16.mxu0 0
      %517 = vmatpush1.bf16.msra.mxu0 0
      %518 = vmatprep.subr.bf16.mxu0 0
      %519 = vmatpush1.bf16.msra.mxu0 0
      %520 = vmatprep.subr.bf16.mxu0 0
      %521 = vmatpush1.bf16.msra.mxu0 0
      %522 = vmatprep.subr.bf16.mxu0 0
      %523 = vmatpush1.bf16.msra.mxu0 0
      %524 = vmatprep.subr.bf16.mxu0 0
      %525 = vmatpush1.bf16.msra.mxu0 0
      %526 = vmatprep.subr.bf16.mxu0 0
      %527 = vmatpush1.bf16.msra.mxu0 0
      %528 = vmatprep.subr.bf16.mxu0 0
      %529 = vmatpush1.bf16.msra.mxu0 0
      %530 = vmatprep.subr.bf16.mxu0 0
      %531 = vmatpush1.bf16.msra.mxu0 0
      %532 = vmatprep.subr.bf16.mxu0 0
      %533 = vmatpush1.bf16.msra.mxu0 0
      %534 = vmatprep.subr.bf16.mxu0 0
      %535 = vmatpush1.bf16.msra.mxu0 0
      %536 = vmatprep.subr.bf16.mxu0 0
      %537 = vmatpush1.bf16.msra.mxu0 0
      %538 = vmatprep.subr.bf16.mxu0 0
      %539 = vmatpush1.bf16.msra.mxu0 0
      %540 = vmatprep.subr.bf16.mxu0 0
      %541 = vmatpush1.bf16.msra.mxu0 0
      %542 = vmatprep.mubr.bf16.mxu0 0
      %543 = vmatmul.mubr.bf16.gmra.mrb[0].mxu0 %v508
      %v544 = vpop.f32.mrb[0].mxu0
      %v545 = vadd.f32 %v484, %v544
      %v546 = vpop.f32.mrb[0].mxu0
      %v547 = vpop.f32.mrb[0].mxu0
      %v548 = vpop.f32.mrb[0].mxu0
      %549 = vdwg.mxu0
      %v550 = vmax.f32 %v545, 0.0
      %vm551 = vcmask 254976
      %552 = vst.msk [vmem:[#allocation8] sm:$0x3] %vm551, %v550
      %v553 = vld [vmem:[%s8] sm:$0xf]
      %v554 = vld [vmem:[%s8 + $0x4] sm:$0xf]
      %v555 = vld [vmem:[#allocation4] sm:$0x1]
      %v556 = vld [vmem:[#allocation4 + $0x1] sm:$0x1]
      %v557 = vld [vmem:[#allocation5] sm:$0x1]
      %v558 = vld [vmem:[#allocation5 + $0x1] sm:$0x1]
      %v559 = vmax.f32 %v557, 1.0
      %v560 = vmax.f32 %v558, 1.0
      %562 = vset.pattern.permute.xlu0 0
      %563 = vperm.xlu0 %562, %v559
      %v564 = vpop.permute.xlu0 %563
      %v566 = vlaneseq
      %v567 = vshrl.u32 %v566, 7
      %v568 = vsub.s32 0, %v567
      %v569 = vrot.slane %v564, %v568
      %571 = vset.pattern.permute.xlu0 0
      %572 = vperm.xlu0 %571, %v560
      %v573 = vpop.permute.xlu0 %572
      %v575 = vlaneseq
      %v576 = vshrl.u32 %v575, 7
      %v577 = vsub.s32 0, %v576
      %v578 = vrot.slane %v573, %v577
      %v579 = vrcp.pop %v569
      %v580 = vmul.f32 %v555, %v579
      %v581 = vrcp.pop %v578
      %v582 = vmul.f32 %v556, %v581
      %v583 = vadd.f32 %v580, 0.0
      %v584 = vadd.f32 %v582, 0.0
      %v585 = vpack.c.bf16 %v583, %v583
      %v586 = vpack.c.bf16 %v584, %v584
      %v587 = vld [vmem:[%s9] sm:$0x1]
      %v589 = vlaneseq
      %v590 = vshrl.u32 %v589, 7
      %v591 = vsub.s32 0, %v590
      %v592 = vrot.slane %v587, %v591
      %v596 = vunpack.c.l.b16 %v585
      %v597 = vunpack.c.l.b16 %v586
      %v598 = vrot.slane %v597, 7
      %v599 = vsel %vm491, %v598, %v596
      %v600 = vpack.c.b16 %v599, %v599
      %v603 = vunpack.c.l.b16 %v553
      %v604 = vunpack.c.l.b16 %v554
      %v605 = vpack.c.b16 %v604, %v603
      %vm607 = vcmask 130048
      %v609 = vsel %vm607, %v600, 0
      %611 = vmatprep.subr.bf16.mxu0 0
      %612 = vmatpush1.bf16.msra.mxu0 %v605
      %613 = vmatprep.subr.bf16.mxu0 0
      %614 = vmatpush1.bf16.msra.mxu0 0
      %615 = vmatprep.subr.bf16.mxu0 0
      %616 = vmatpush1.bf16.msra.mxu0 0
      %617 = vmatprep.subr.bf16.mxu0 0
      %618 = vmatpush1.bf16.msra.mxu0 0
      %619 = vmatprep.subr.bf16.mxu0 0
      %620 = vmatpush1.bf16.msra.mxu0 0
      %621 = vmatprep.subr.bf16.mxu0 0
      %622 = vmatpush1.bf16.msra.mxu0 0
      %623 = vmatprep.subr.bf16.mxu0 0
      %624 = vmatpush1.bf16.msra.mxu0 0
      %625 = vmatprep.subr.bf16.mxu0 0
      %626 = vmatpush1.bf16.msra.mxu0 0
      %627 = vmatprep.subr.bf16.mxu0 0
      %628 = vmatpush1.bf16.msra.mxu0 0
      %629 = vmatprep.subr.bf16.mxu0 0
      %630 = vmatpush1.bf16.msra.mxu0 0
      %631 = vmatprep.subr.bf16.mxu0 0
      %632 = vmatpush1.bf16.msra.mxu0 0
      %633 = vmatprep.subr.bf16.mxu0 0
      %634 = vmatpush1.bf16.msra.mxu0 0
      %635 = vmatprep.subr.bf16.mxu0 0
      %636 = vmatpush1.bf16.msra.mxu0 0
      %637 = vmatprep.subr.bf16.mxu0 0
      %638 = vmatpush1.bf16.msra.mxu0 0
      %639 = vmatprep.subr.bf16.mxu0 0
      %640 = vmatpush1.bf16.msra.mxu0 0
      %641 = vmatprep.subr.bf16.mxu0 0
      %642 = vmatpush1.bf16.msra.mxu0 0
      %643 = vmatprep.mubr.bf16.mxu0 0
      %644 = vmatmul.mubr.bf16.gmra.mrb[0].mxu0 %v609
      %v645 = vpop.f32.mrb[0].mxu0
      %v646 = vadd.f32 %v592, %v645
      %v647 = vpop.f32.mrb[0].mxu0
      %v648 = vpop.f32.mrb[0].mxu0
      %v649 = vpop.f32.mrb[0].mxu0
      %650 = vdwg.mxu0
      %v651 = vmax.f32 %v646, 0.0
      %653 = vrot.lane.b32.xlu0 %v651, 32
      %v654 = vpop.permute.xlu0 %653
      %vm656 = vcmask 517376
      %657 = vst.msk [vmem:[#allocation8] sm:$0x3] %vm656, %v654
      %v658 = vld [vmem:[%s10] sm:$0xf]
      %v659 = vld [vmem:[%s10 + $0x4] sm:$0xf]
      %v660 = vld [vmem:[%s10 + $0x8] sm:$0x3]
      %v661 = vld [vmem:[#allocation6] sm:$0x1]
      %v662 = vld [vmem:[#allocation6 + $0x1] sm:$0x1]
      %v663 = vld [vmem:[#allocation7] sm:$0x1]
      %v664 = vld [vmem:[#allocation7 + $0x1] sm:$0x1]
      %v665 = vmax.f32 %v663, 1.0
      %v666 = vmax.f32 %v664, 1.0
      %668 = vset.pattern.permute.xlu0 0
      %669 = vperm.xlu0 %668, %v665
      %v670 = vpop.permute.xlu0 %669
      %v672 = vlaneseq
      %v673 = vshrl.u32 %v672, 7
      %v674 = vsub.s32 0, %v673
      %v675 = vrot.slane %v670, %v674
      %677 = vset.pattern.permute.xlu0 0
      %678 = vperm.xlu0 %677, %v666
      %v679 = vpop.permute.xlu0 %678
      %v681 = vlaneseq
      %v682 = vshrl.u32 %v681, 7
      %v683 = vsub.s32 0, %v682
      %v684 = vrot.slane %v679, %v683
      %v685 = vrcp.pop %v675
      %v686 = vmul.f32 %v661, %v685
      %v687 = vrcp.pop %v684
      %v688 = vmul.f32 %v662, %v687
      %v689 = vadd.f32 %v686, 0.0
      %v690 = vadd.f32 %v688, 0.0
      %v691 = vpack.c.bf16 %v689, %v689
      %v692 = vpack.c.bf16 %v690, %v690
      %v693 = vld [vmem:[%s11] sm:$0x1]
      %v695 = vlaneseq
      %v696 = vshrl.u32 %v695, 7
      %v697 = vsub.s32 0, %v696
      %v698 = vrot.slane %v693, %v697
      %v702 = vunpack.c.l.b16 %v691
      %v703 = vunpack.c.l.b16 %v692
      %v704 = vrot.slane %v703, 7
      %v705 = vsel %vm491, %v704, %v702
      %v706 = vpack.c.b16 %v705, %v705
      %v710 = vunpack.c.l.b16 %v658
      %v711 = vunpack.c.l.b16 %v659
      %v712 = vunpack.c.l.b16 %v660
      %v713 = vpack.c.b16 %v711, %v710
      %v714 = vpack.c.b16 %v712, %v712
      %vm716 = vcmask 162816
      %v718 = vsel %vm716, %v706, 0
      %vm720 = vcmask 1041408
      %v722 = vsel %vm720, %v714, 0
      %724 = vmatprep.subr.bf16.mxu0 0
      %725 = vmatpush1.bf16.msra.mxu0 %v713
      %726 = vmatprep.subr.bf16.mxu0 0
      %727 = vmatpush1.bf16.msra.mxu0 %v722
      %728 = vmatprep.subr.bf16.mxu0 0
      %729 = vmatpush1.bf16.msra.mxu0 0
      %730 = vmatprep.subr.bf16.mxu0 0
      %731 = vmatpush1.bf16.msra.mxu0 0
      %732 = vmatprep.subr.bf16.mxu0 0
      %733 = vmatpush1.bf16.msra.mxu0 0
      %734 = vmatprep.subr.bf16.mxu0 0
      %735 = vmatpush1.bf16.msra.mxu0 0
      %736 = vmatprep.subr.bf16.mxu0 0
      %737 = vmatpush1.bf16.msra.mxu0 0
      %738 = vmatprep.subr.bf16.mxu0 0
      %739 = vmatpush1.bf16.msra.mxu0 0
      %740 = vmatprep.subr.bf16.mxu0 0
      %741 = vmatpush1.bf16.msra.mxu0 0
      %742 = vmatprep.subr.bf16.mxu0 0
      %743 = vmatpush1.bf16.msra.mxu0 0
      %744 = vmatprep.subr.bf16.mxu0 0
      %745 = vmatpush1.bf16.msra.mxu0 0
      %746 = vmatprep.subr.bf16.mxu0 0
      %747 = vmatpush1.bf16.msra.mxu0 0
      %748 = vmatprep.subr.bf16.mxu0 0
      %749 = vmatpush1.bf16.msra.mxu0 0
      %750 = vmatprep.subr.bf16.mxu0 0
      %751 = vmatpush1.bf16.msra.mxu0 0
      %752 = vmatprep.subr.bf16.mxu0 0
      %753 = vmatpush1.bf16.msra.mxu0 0
      %754 = vmatprep.subr.bf16.mxu0 0
      %755 = vmatpush1.bf16.msra.mxu0 0
      %756 = vmatprep.mubr.bf16.mxu0 0
      %757 = vmatmul.mubr.bf16.gmra.mrb[0].mxu0 %v718
      %v758 = vpop.f32.mrb[0].mxu0
      %v759 = vadd.f32 %v698, %v758
      %v760 = vpop.f32.mrb[0].mxu0
      %v761 = vpop.f32.mrb[0].mxu0
      %v762 = vpop.f32.mrb[0].mxu0
      %763 = vdwg.mxu0
      %v764 = vmax.f32 %v759, 0.0
      %766 = vrot.lane.b32.xlu0 %v764, 64
      %v767 = vpop.permute.xlu0 %766
      %vm769 = vcmask 779776
      %770 = vst.msk [vmem:[#allocation8] sm:$0x3] %vm769, %v767
      %v771 = vld [vmem:[#allocation8] sm:$0x3]
      %v772 = vld [vmem:[%s12] sm:$0xff]
      %v773 = vld [vmem:[%s12 + $0x8] sm:$0xff]
      %v774 = vld [vmem:[%s12 + $0x10] sm:$0xff]
      %v775 = vld [vmem:[%s12 + $0x18] sm:$0xff]
      %v776 = vld [vmem:[%s12 + $0x20] sm:$0xff]
      %v777 = vld [vmem:[%s12 + $0x28] sm:$0xff]
      %v778 = vld [vmem:[%s12 + $0x30] sm:$0xff]
      %v779 = vld [vmem:[%s12 + $0x38] sm:$0xff]
      %v780 = vld [vmem:[%s12 + $0x40] sm:$0xff]
      %v781 = vld [vmem:[%s12 + $0x48] sm:$0xff]
      %v782 = vld [vmem:[%s12 + $0x50] sm:$0xff]
      %v783 = vld [vmem:[%s12 + $0x58] sm:$0xff]
      %v784 = vld [vmem:[%s13] sm:$0x1]
      %v786 = vlaneseq
      %v787 = vshrl.u32 %v786, 7
      %v788 = vsub.s32 0, %v787
      %v789 = vrot.slane %v784, %v788
      %vm791 = vcmask 785408
      %v793 = vsel %vm791, %v771, 0
      %795 = vmatprep.subr.mxu0 0.0
      %796 = vmatpush1.msra.mxu0 %v772
      %797 = vmatprep.subr.mxu0 0.0
      %798 = vmatpush1.msra.mxu0 %v773
      %799 = vmatprep.subr.mxu0 0.0
      %800 = vmatpush1.msra.mxu0 %v774
      %801 = vmatprep.subr.mxu0 0.0
      %802 = vmatpush1.msra.mxu0 %v775
      %803 = vmatprep.subr.mxu0 0.0
      %804 = vmatpush1.msra.mxu0 %v776
      %805 = vmatprep.subr.mxu0 0.0
      %806 = vmatpush1.msra.mxu0 %v777
      %807 = vmatprep.subr.mxu0 0.0
      %808 = vmatpush1.msra.mxu0 %v778
      %809 = vmatprep.subr.mxu0 0.0
      %810 = vmatpush1.msra.mxu0 %v779
      %811 = vmatprep.subr.mxu0 0.0
      %812 = vmatpush1.msra.mxu0 %v780
      %813 = vmatprep.subr.mxu0 0.0
      %814 = vmatpush1.msra.mxu0 %v781
      %815 = vmatprep.subr.mxu0 0.0
      %816 = vmatpush1.msra.mxu0 %v782
      %817 = vmatprep.subr.mxu0 0.0
      %818 = vmatpush1.msra.mxu0 %v783
      %819 = vmatprep.subr.mxu0 0.0
      %820 = vmatpush1.msra.mxu0 0.0
      %821 = vmatprep.subr.mxu0 0.0
      %822 = vmatpush1.msra.mxu0 0.0
      %823 = vmatprep.subr.mxu0 0.0
      %824 = vmatpush1.msra.mxu0 0.0
      %825 = vmatprep.subr.mxu0 0.0
      %826 = vmatpush1.msra.mxu0 0.0
      %827 = vmatprep.subr.mxu0 0.0
      %828 = vmatpush1.msra.mxu0 0.0
      %829 = vmatprep.subr.mxu0 0.0
      %830 = vmatpush1.msra.mxu0 0.0
      %831 = vmatprep.subr.mxu0 0.0
      %832 = vmatpush1.msra.mxu0 0.0
      %833 = vmatprep.subr.mxu0 0.0
      %834 = vmatpush1.msra.mxu0 0.0
      %835 = vmatprep.subr.mxu0 0.0
      %836 = vmatpush1.msra.mxu0 0.0
      %837 = vmatprep.subr.mxu0 0.0
      %838 = vmatpush1.msra.mxu0 0.0
      %839 = vmatprep.subr.mxu0 0.0
      %840 = vmatpush1.msra.mxu0 0.0
      %841 = vmatprep.subr.mxu0 0.0
      %842 = vmatpush1.msra.mxu0 0.0
      %843 = vmatprep.subr.mxu0 0.0
      %844 = vmatpush1.msra.mxu0 0.0
      %845 = vmatprep.subr.mxu0 0.0
      %846 = vmatpush1.msra.mxu0 0.0
      %847 = vmatprep.subr.mxu0 0.0
      %848 = vmatpush1.msra.mxu0 0.0
      %849 = vmatprep.subr.mxu0 0.0
      %850 = vmatpush1.msra.mxu0 0.0
      %851 = vmatprep.subr.mxu0 0.0
      %852 = vmatpush1.msra.mxu0 0.0
      %853 = vmatprep.subr.mxu0 0.0
      %854 = vmatpush1.msra.mxu0 0.0
      %855 = vmatprep.subr.mxu0 0.0
      %856 = vmatpush1.msra.mxu0 0.0
      %857 = vmatprep.subr.mxu0 0.0
      %858 = vmatpush1.msra.mxu0 0.0
      %859 = vmatprep.mubr.f32.mxu0 0.0
      %860 = vmatmul.mubr.f32.gmra.mrb[0].mxu0 %v793
      %v861 = vpop.f32.mrb[0].mxu0
      %v862 = vadd.f32 %v789, %v861
      %v863 = vpop.f32.mrb[0].mxu0
      %864 = vdwg.mxu0
      %v865 = vmax.f32 %v862, 0.0
      %v866 = vld [vmem:[%s14] sm:$0xff]
      %v867 = vld [vmem:[%s14 + $0x8] sm:$0xff]
      %v868 = vld [vmem:[%s14 + $0x10] sm:$0xff]
      %v869 = vld [vmem:[%s14 + $0x18] sm:$0xff]
      %v870 = vld [vmem:[%s14 + $0x20] sm:$0xff]
      %v871 = vld [vmem:[%s14 + $0x28] sm:$0xff]
      %v872 = vld [vmem:[%s14 + $0x30] sm:$0xff]
      %v873 = vld [vmem:[%s14 + $0x38] sm:$0xff]
      %v874 = vld [vmem:[%s15] sm:$0x1]
      %v876 = vlaneseq
      %v877 = vshrl.u32 %v876, 7
      %v878 = vsub.s32 0, %v877
      %v879 = vrot.slane %v874, %v878
      %vm881 = vcmask 523264
      %v883 = vsel %vm881, %v865, 0
      %885 = vmatprep.subr.mxu0 0.0
      %886 = vmatpush1.msra.mxu0 %v866
      %887 = vmatprep.subr.mxu0 0.0
      %888 = vmatpush1.msra.mxu0 %v867
      %889 = vmatprep.subr.mxu0 0.0
      %890 = vmatpush1.msra.mxu0 %v868
      %891 = vmatprep.subr.mxu0 0.0
      %892 = vmatpush1.msra.mxu0 %v869
      %893 = vmatprep.subr.mxu0 0.0
      %894 = vmatpush1.msra.mxu0 %v870
      %895 = vmatprep.subr.mxu0 0.0
      %896 = vmatpush1.msra.mxu0 %v871
      %897 = vmatprep.subr.mxu0 0.0
      %898 = vmatpush1.msra.mxu0 %v872
      %899 = vmatprep.subr.mxu0 0.0
      %900 = vmatpush1.msra.mxu0 %v873
      %901 = vmatprep.subr.mxu0 0.0
      %902 = vmatpush1.msra.mxu0 0.0
      %903 = vmatprep.subr.mxu0 0.0
      %904 = vmatpush1.msra.mxu0 0.0
      %905 = vmatprep.subr.mxu0 0.0
      %906 = vmatpush1.msra.mxu0 0.0
      %907 = vmatprep.subr.mxu0 0.0
      %908 = vmatpush1.msra.mxu0 0.0
      %909 = vmatprep.subr.mxu0 0.0
      %910 = vmatpush1.msra.mxu0 0.0
      %911 = vmatprep.subr.mxu0 0.0
      %912 = vmatpush1.msra.mxu0 0.0
      %913 = vmatprep.subr.mxu0 0.0
      %914 = vmatpush1.msra.mxu0 0.0
      %915 = vmatprep.subr.mxu0 0.0
      %916 = vmatpush1.msra.mxu0 0.0
      %917 = vmatprep.subr.mxu0 0.0
      %918 = vmatpush1.msra.mxu0 0.0
      %919 = vmatprep.subr.mxu0 0.0
      %920 = vmatpush1.msra.mxu0 0.0
      %921 = vmatprep.subr.mxu0 0.0
      %922 = vmatpush1.msra.mxu0 0.0
      %923 = vmatprep.subr.mxu0 0.0
      %924 = vmatpush1.msra.mxu0 0.0
      %925 = vmatprep.subr.mxu0 0.0
      %926 = vmatpush1.msra.mxu0 0.0
      %927 = vmatprep.subr.mxu0 0.0
      %928 = vmatpush1.msra.mxu0 0.0
      %929 = vmatprep.subr.mxu0 0.0
      %930 = vmatpush1.msra.mxu0 0.0
      %931 = vmatprep.subr.mxu0 0.0
      %932 = vmatpush1.msra.mxu0 0.0
      %933 = vmatprep.subr.mxu0 0.0
      %934 = vmatpush1.msra.mxu0 0.0
      %935 = vmatprep.subr.mxu0 0.0
      %936 = vmatpush1.msra.mxu0 0.0
      %937 = vmatprep.subr.mxu0 0.0
      %938 = vmatpush1.msra.mxu0 0.0
      %939 = vmatprep.subr.mxu0 0.0
      %940 = vmatpush1.msra.mxu0 0.0
      %941 = vmatprep.subr.mxu0 0.0
      %942 = vmatpush1.msra.mxu0 0.0
      %943 = vmatprep.subr.mxu0 0.0
      %944 = vmatpush1.msra.mxu0 0.0
      %945 = vmatprep.subr.mxu0 0.0
      %946 = vmatpush1.msra.mxu0 0.0
      %947 = vmatprep.subr.mxu0 0.0
      %948 = vmatpush1.msra.mxu0 0.0
      %949 = vmatprep.mubr.f32.mxu0 0.0
      %950 = vmatmul.mubr.f32.gmra.mrb[0].mxu0 %v883
      %v951 = vpop.f32.mrb[0].mxu0
      %v952 = vadd.f32 %v879, %v951
      %v953 = vpop.f32.mrb[0].mxu0
      %954 = vdwg.mxu0
      %955 = vst [vmem:[#allocation9] sm:$0x3] %v952
    $region77: #{tpu_custom_call.1} parent=1 // pred_fallthru
      _
    // Predicated region
    $region78: #{tpu_custom_call.1} parent=1 // pred_check
      _
    $region79: #{tpu_custom_call.1} parent=1 // pred_check_branch
      %957 = sbr.rel (0) target = $region81
    $region80: #{tpu_custom_call.1} parent=1 // pred_region
      %s959 = ssub.s32 32, 32
      %960 = vsyncadd [#allocation10], %s959
      %s962 = sshll.u32 [#allocation9], 4
      %s963 = int_to_ptr.vmem [resolvable:$true] %s962
      %965 = dma.vmem_to_hbm [thread:$0]  %s963, 32, %s16, [#allocation10]
    $region81: #{tpu_custom_call.1} parent=1 // pred_fallthru
      _
    // Predicated region
    $region82: #{tpu_custom_call.1} parent=1 // pred_check
      _
    $region83: #{tpu_custom_call.1} parent=1 // pred_check_branch
      %967 = sbr.rel (0) target = $region85
    $region84: #{tpu_custom_call.1} parent=1 // pred_region
      %968 = dma.done [#allocation10], 32
    $region85: #{tpu_custom_call.1} parent=1 // pred_fallthru
      _
    %969 = vsyncpa [#allocation10], 1

</llo_original>
